<compile_context>
chip_gen: v7x
topology: tpu7x:2x2x1
jax: 0.10.0
libtpu: 0.0.40
codegen_flags: <defaults>
</compile_context>

<pallas_src>
import jax
import jax.numpy as jnp
from jax.experimental import pallas as pl
from jax.experimental.pallas import tpu as pltpu


_NEG_BIAS = -1e30  # bias on padded atoms: exp(logit - max) underflows to 0 exactly


def _round_up(x, m):
    return (x + m - 1) // m * m


def _pick_batch_tile(batch):
    """Large tiles amortize the ~0.35us/grid-step overhead; once the batch is
    big enough, keep >=2 grid steps (tiles rounded to 128 rows) so the
    "parallel" axis can shard across v7x's two TensorCores."""
    if batch < 256:
        return _round_up(batch, 8)          # single grid step
    return min(512, _round_up((batch + 1) // 2, 128))


def _resident_spec(block_shape):
    """Weights/biases/R live at a fixed grid index; request single buffering
    to save VMEM. Falls back silently if pipeline_mode is unavailable."""
    index_map = lambda b: (0,) * len(block_shape)
    try:
        return pl.BlockSpec(block_shape, index_map, pipeline_mode=pl.Buffered(1))
    except Exception:                      # older jax without pipeline_mode
        return pl.BlockSpec(block_shape, index_map)


# -----------------------------------------------------------------------------
# Kernel: one batch tile -> Q-values for all actions (lane-dense, padded to 128)
# -----------------------------------------------------------------------------
def rainbow_kernel(x_ref, wf_ref, bf_ref, wh_ref, bh_ref, r_ref, q_ref):
    # x_ref:  (TB, D_pad)        bf16 flattened state tile
    # wf_ref: (D_pad, F_pad)     bf16 phi weight,    bf_ref: (1, F_pad) f32
    # wh_ref: (F_pad, O*A_pad)   bf16 dueling-combined head weights
    # bh_ref: (1, O*A_pad)       f32  head bias (padded atoms = -1e30)
    # r_ref:  (O*A_pad, 2*A_pad) bf16 block reduction matrix [atoms | ones]
    # q_ref:  (TB, A_pad)        f32  Q in lanes 0..O-1, zeros elsewhere
    a_pad = r_ref.shape[-1] // 2
    n_heads = wh_ref.shape[-1] // a_pad

    # phi: Flatten -> Linear -> ReLU (bf16 MXU operands, f32 accumulate)
    feats = jnp.dot(x_ref[...], wf_ref[...], preferred_element_type=jnp.float32)
    feats = jnp.maximum(feats + bf_ref[...], 0.0)                   # (TB, F_pad)

    # dueling heads, pre-combined at pack time -> ONE lane-dense MXU pass
    logits = jnp.dot(feats.astype(jnp.bfloat16), wh_ref[...],
                     preferred_element_type=jnp.float32) + bh_ref[...]  # (TB, O*A_pad)

    # per-head softmax numerators, kept 2-D / lane-dense (no (TB,O,A) stack)
    e_blocks = []
    for i in range(n_heads):
        blk = logits[:, i * a_pad:(i + 1) * a_pad]                  # (TB, A_pad)
        m = jnp.max(blk, axis=-1, keepdims=True)                    # XLU reduce
        e_blocks.append(jnp.exp(blk - m).astype(jnp.bfloat16))      # EUP
    e = jnp.concatenate(e_blocks, axis=-1)                          # (TB, O*A_pad)

    # Both softmax reductions on the MXU in one block-structured matmul:
    #   res[:, i]         = sum_a e_i[a] * atom[a]   (numerator, head i -> lane i)
    #   res[:, a_pad + i] = sum_a e_i[a]             (denominator)
    # Unused numerator lanes are 0, unused denominator lanes sum all of e (>0),
    # so the division below is NaN/Inf free.
    res = jnp.dot(e, r_ref[...], preferred_element_type=jnp.float32)  # (TB, 2*A_pad)
    num = res[:, :a_pad]
    den = res[:, a_pad:]
    q_ref[...] = num * pl.reciprocal(den)       # exact recip; single unmasked store


# -----------------------------------------------------------------------------
# Parameter construction (semantics of the PyTorch module), padding & fusion
# -----------------------------------------------------------------------------
def _noisy_linear_effective(key, n_in, n_out, sigma_coeff):
    """NoisyLinear with one fixed factorized-Gaussian noise sample folded in."""
    k_mw, k_mb, k_ei, k_eo = jax.random.split(key, 4)
    bound = 1.0 / jnp.sqrt(float(n_in))
    mu_w = jax.random.uniform(k_mw, (n_out, n_in), minval=-bound, maxval=bound)
    mu_b = jax.random.uniform(k_mb, (n_out,), minval=-bound, maxval=bound)
    sigma = sigma_coeff / jnp.sqrt(float(n_in))
    f = lambda t: jnp.sign(t) * jnp.sqrt(jnp.abs(t))
    eps_in = f(jax.random.normal(k_ei, (n_in,)))
    eps_out = f(jax.random.normal(k_eo, (n_out,)))
    w = mu_w + sigma * jnp.outer(eps_out, eps_in)
    b = mu_b + sigma * eps_out
    return w.T.astype(jnp.float32), b.astype(jnp.float32)   # (in, out), (out,)


def make_raw_params(key, input_shape, n_output, n_features, n_atoms,
                    v_min, v_max, sigma_coeff):
    C, H, W = input_shape
    D = C * H * W
    k_fw, k_fb, k_pv, *k_pa = jax.random.split(key, 3 + n_output)

    # features network phi: Flatten -> Linear(D, n_features) -> ReLU
    bound = 1.0 / jnp.sqrt(float(D))
    wf = jax.random.uniform(k_fw, (D, n_features),
                            minval=-bound, maxval=bound).astype(jnp.float32)
    bf = jax.random.uniform(k_fb, (n_features,),
                            minval=-bound, maxval=bound).astype(jnp.float32)

    wpv, bpv = _noisy_linear_effective(k_pv, n_features, n_atoms, sigma_coeff)

    wpa_l, bpa_l = [], []
    for i in range(n_output):
        w_i, b_i = _noisy_linear_effective(k_pa[i], n_features, n_atoms, sigma_coeff)
        wpa_l.append(w_i)
        bpa_l.append(b_i)
    wpa = jnp.stack(wpa_l, axis=0)                     # (O, F, A)
    bpa = jnp.stack(bpa_l, axis=0)                     # (O, A)

    # atom support: torch.arange(v_min, v_max + delta, delta) == linspace here
    av = jnp.linspace(v_min, v_max, n_atoms, dtype=jnp.float32)   # (A,)
    return wf, bf, wpv, bpv, wpa, bpa, av


def pack_params(raw):
    """Pad D/F/A to multiples of 128, fold the dueling combination into the
    head weights (it is linear), build the block-structured reduction matrix R,
    cast MXU operands to bf16."""
    wf, bf, wpv, bpv, wpa, bpa, av = raw
    D, F = wf.shape
    O, _, A = wpa.shape
    D_pad = _round_up(D, 128)
    F_pad = _round_up(F, 128)
    A_pad = _round_up(A, 128)

    wf_p = jnp.zeros((D_pad, F_pad), jnp.float32).at[:D, :F].set(wf)
    bf_p = jnp.zeros((1, F_pad), jnp.float32).at[0, :F].set(bf)

    # dueling fold:  logits_i = feats @ (Wv + Wa_i - mean_j Wa_j)
    #                           + (bv + ba_i - mean_j ba_j)
    wa_mean = jnp.mean(wpa, axis=0)
    ba_mean = jnp.mean(bpa, axis=0)
    wh_p = jnp.zeros((F_pad, O * A_pad), jnp.float32)
    bh_p = jnp.full((1, O * A_pad), _NEG_BIAS, jnp.float32)  # pads -> prob 0
    for i in range(O):
        off = i * A_pad
        wh_p = wh_p.at[:F, off:off + A].set(wpv + wpa[i] - wa_mean)
        bh_p = bh_p.at[0, off:off + A].set(bpv + bpa[i] - ba_mean)

    # block-structured reduction matrix R (O*A_pad, 2*A_pad):
    #   lane i          <- atom values on head-i rows   (softmax numerator)
    #   lane A_pad + i  <- ones on head-i rows          (softmax denominator)
    #   unused denominator lanes <- all ones (keeps the divide NaN/Inf free)
    r = jnp.zeros((O * A_pad, 2 * A_pad), jnp.float32)
    for i in range(O):
        r = r.at[i * A_pad:i * A_pad + A, i].set(av)
        r = r.at[i * A_pad:(i + 1) * A_pad, A_pad + i].set(1.0)
    r = r.at[:, A_pad + O:].set(1.0)

    # TODO(synk): on v7x, wf / x could be fp8 (e4m3) for the phi matmul.
    return dict(
        wf=wf_p.astype(jnp.bfloat16),   # MXU operands in bf16
        bf=bf_p,                        # biases stay f32 (added post-accumulate)
        wh=wh_p.astype(jnp.bfloat16),
        bh=bh_p,
        r=r.astype(jnp.bfloat16),
        n_output=int(O), n_input=int(D),
        d_pad=int(D_pad), f_pad=int(F_pad), a_pad=int(A_pad),
    )


# -----------------------------------------------------------------------------
# Wrapper: batch-tiled pallas_call
# -----------------------------------------------------------------------------
def rainbow_forward(state, packed):
    """state: (B, C, H, W) float32 -> Q-values (B, n_output) float32."""
    B = state.shape[0]
    D = packed["n_input"]
    D_pad, F_pad, A_pad = packed["d_pad"], packed["f_pad"], packed["a_pad"]
    O = packed["n_output"]
    h_dim = O * A_pad

    # no f32 staging copy: cast straight to bf16, pad (bf16) only if needed
    x = state.reshape(B, -1).astype(jnp.bfloat16)
    assert x.shape[1] == D
    TB = _pick_batch_tile(B)
    B_pad = _round_up(B, TB)
    pad_rows, pad_cols = B_pad - B, D_pad - D
    if pad_rows or pad_cols:
        x = jnp.pad(x, ((0, pad_rows), (0, pad_cols)))
    nb = B_pad // TB

    wf, bf, wh, bh, r = (packed["wf"], packed["bf"], packed["wh"],
                         packed["bh"], packed["r"])

    grid_spec = pltpu.PrefetchScalarGridSpec(
        num_scalar_prefetch=0,
        grid=(nb,),
        in_specs=[
            pl.BlockSpec((TB, D_pad), lambda b: (b, 0)),   # x: tiled over batch
            _resident_spec((D_pad, F_pad)),                # phi weight
            _resident_spec((1, F_pad)),                    # phi bias
            _resident_spec((F_pad, h_dim)),                # fused head weights
            _resident_spec((1, h_dim)),                    # fused head bias
            _resident_spec((h_dim, 2 * A_pad)),            # reduction matrix R
        ],
        out_specs=pl.BlockSpec((TB, A_pad), lambda b: (b, 0)),   # lane-dense out
    )

    flops = 2 * B_pad * (D_pad * F_pad + F_pad * h_dim + h_dim * 2 * A_pad)
    bytes_accessed = (B_pad * D_pad * 2 + B_pad * A_pad * 4
                      + (wf.size + wh.size + r.size) * 2
                      + (bf.size + bh.size) * 4)
    cost = pl.CostEstimate(flops=flops,
                           transcendentals=B_pad * (h_dim + A_pad),
                           bytes_accessed=bytes_accessed)

    q = pl.pallas_call(
        rainbow_kernel,
        out_shape=jax.ShapeDtypeStruct((B_pad, A_pad), jnp.float32),
        grid_spec=grid_spec,
        compiler_params=pltpu.CompilerParams(
            dimension_semantics=("parallel",),     # megacore / v7x second TC
            # footprint at TB=512 is < 8 MiB; 32 MiB is safe on every
            # generation and raises v5e's 16 MiB default scoped limit.
            vmem_limit_bytes=32 * 1024 * 1024,
        ),
        cost_estimate=cost,
    )(x, wf, bf, wh, bh, r)
    return q[:B, :O]


# -----------------------------------------------------------------------------
# References
# -----------------------------------------------------------------------------
def reference_forward_f32(state, raw):
    """Pure-f32 semantics of the original module (noise folded in)."""
    wf, bf, wpv, bpv, wpa, bpa, av = raw
    B = state.shape[0]
    x = state.reshape(B, -1)
    feats = jnp.maximum(x @ wf + bf[None, :], 0.0)
    a_pv = feats @ wpv + bpv[None, :]
    a_pa = jnp.einsum('bf,ofa->boa', feats, wpa) + bpa[None]
    mean_pa = jnp.mean(a_pa, axis=1, keepdims=True)
    logits = a_pv[:, None, :] + a_pa - mean_pa
    p = jax.nn.softmax(logits, axis=-1)
    return jnp.sum(p * av[None, None, :], axis=-1)


def reference_forward_packed(state, packed):
    """Dense jnp re-implementation of the exact kernel math on the packed
    (already bf16-rounded) parameters — isolates Pallas-specific bugs."""
    O, A_pad = packed["n_output"], packed["a_pad"]
    D, D_pad = packed["n_input"], packed["d_pad"]
    B = state.shape[0]
    x = state.reshape(B, -1).astype(jnp.bfloat16).astype(jnp.float32)
    if D_pad != D:
        x = jnp.pad(x, ((0, 0), (0, D_pad - D)))
    feats = jnp.maximum(x @ packed["wf"].astype(jnp.float32) + packed["bf"], 0.0)
    feats = feats.astype(jnp.bfloat16).astype(jnp.float32)
    logits = feats @ packed["wh"].astype(jnp.float32) + packed["bh"]
    lg = logits.reshape(B, O, A_pad)
    e = jnp.exp(lg - jnp.max(lg, axis=-1, keepdims=True))
    e = e.astype(jnp.bfloat16).astype(jnp.float32).reshape(B, O * A_pad)
    res = e @ packed["r"].astype(jnp.float32)
    q = res[:, :A_pad] / res[:, A_pad:]
    return q[:, :O]


if __name__ == "__main__":
    # small shapes consistent with the module: batch=2, input (4, 16, 16),
    # n_features=32, n_output=4 actions, n_atoms=51
    input_shape = (4, 16, 16)
    B, n_output, n_features, n_atoms = 2, 4, 32, 51
    v_min, v_max, sigma_coeff = -10.0, 10.0, 0.5

    key = jax.random.PRNGKey(0)
    k_state, k_params = jax.random.split(key)
    state = jax.random.normal(k_state, (B,) + input_shape, dtype=jnp.float32)

    raw = make_raw_params(k_params, input_shape, n_output, n_features,
                          n_atoms, v_min, v_max, sigma_coeff)
    packed = pack_params(raw)

    q = jax.block_until_ready(rainbow_forward(state, packed))
    assert q.shape == (B, n_output)

    # tight check vs a dense jnp re-implementation of the same packed math
    q_packed = reference_forward_packed(state, packed)
    assert jnp.allclose(q, q_packed, atol=1e-2, rtol=1e-2), (q, q_packed)

    # loose sanity check vs the pure-f32 module semantics
    q_f32 = reference_forward_f32(state, raw)
    assert jnp.allclose(q, q_f32, atol=0.5, rtol=0.1), (q, q_f32)

    print("KERNEL_OK")
</pallas_src>

<mosaic_0001>
module attributes {stable_mosaic.version = 11 : i64} {
  func.func @rainbow_kernel(%arg0: i32, %arg1: memref<8x1024xbf16, #tpu.memory_space<vmem>>, %arg2: memref<1024x128xbf16, #tpu.memory_space<vmem>>, %arg3: memref<1x128xf32, #tpu.memory_space<vmem>>, %arg4: memref<128x512xbf16, #tpu.memory_space<vmem>>, %arg5: memref<1x512xf32, #tpu.memory_space<vmem>>, %arg6: memref<512x256xbf16, #tpu.memory_space<vmem>>, %arg7: memref<8x128xf32, #tpu.memory_space<vmem>>) attributes {dimension_semantics = [#tpu.dimension_semantics<parallel>], iteration_bounds = array<i64: 1>, scalar_prefetch = 0 : i64, scratch_operands = 0 : i64, tpu.core_type = #tpu.core_type<tc>, window_params = [{transform_indices = @transform_0, window_bounds = array<i64: 8, 1024>}, {pipeline_mode = #tpu.pipeline_mode<synchronous>, transform_indices = @transform_1, window_bounds = array<i64: 1024, 128>}, {pipeline_mode = #tpu.pipeline_mode<synchronous>, transform_indices = @transform_2, window_bounds = array<i64: 1, 128>}, {pipeline_mode = #tpu.pipeline_mode<synchronous>, transform_indices = @transform_3, window_bounds = array<i64: 128, 512>}, {pipeline_mode = #tpu.pipeline_mode<synchronous>, transform_indices = @transform_4, window_bounds = array<i64: 1, 512>}, {pipeline_mode = #tpu.pipeline_mode<synchronous>, transform_indices = @transform_5, window_bounds = array<i64: 512, 256>}, {transform_indices = @transform_6, window_bounds = array<i64: 8, 128>}]} {
    %c0 = arith.constant 0 : index
    %c0_0 = arith.constant 0 : index
    %0 = vector.load %arg1[%c0, %c0_0] : memref<8x1024xbf16, #tpu.memory_space<vmem>>, vector<8x1024xbf16>
    %c0_1 = arith.constant 0 : index
    %c0_2 = arith.constant 0 : index
    %1 = vector.load %arg2[%c0_1, %c0_2] : memref<1024x128xbf16, #tpu.memory_space<vmem>>, vector<1024x128xbf16>
    %cst = arith.constant dense<0.000000e+00> : vector<8x128xf32>
    %2 = tpu.matmul %0, %1, %cst {dimension_numbers = #tpu.dot_dimension_numbers<[1], [0], [0], [1], [0, 0, 1, 1], [], []>} : vector<8x1024xbf16>, vector<1024x128xbf16>, vector<8x128xf32> -> vector<8x128xf32>
    %c0_3 = arith.constant 0 : index
    %c0_4 = arith.constant 0 : index
    %3 = vector.load %arg3[%c0_3, %c0_4] : memref<1x128xf32, #tpu.memory_space<vmem>>, vector<1x128xf32>
    %4 = vector.broadcast %3 : vector<1x128xf32> to vector<8x128xf32>
    %5 = arith.addf %2, %4 : vector<8x128xf32>
    %cst_5 = arith.constant 0.000000e+00 : f32
    %6 = vector.broadcast %cst_5 : f32 to vector<8x128xf32>
    %7 = arith.maximumf %5, %6 : vector<8x128xf32>
    %8 = arith.truncf %7 : vector<8x128xf32> to vector<8x128xbf16>
    %c0_6 = arith.constant 0 : index
    %c0_7 = arith.constant 0 : index
    %9 = vector.load %arg4[%c0_6, %c0_7] : memref<128x512xbf16, #tpu.memory_space<vmem>>, vector<128x512xbf16>
    %cst_8 = arith.constant dense<0.000000e+00> : vector<8x512xf32>
    %10 = tpu.matmul %8, %9, %cst_8 {dimension_numbers = #tpu.dot_dimension_numbers<[1], [0], [0], [1], [0, 0, 1, 1], [], []>} : vector<8x128xbf16>, vector<128x512xbf16>, vector<8x512xf32> -> vector<8x512xf32>
    %c0_9 = arith.constant 0 : index
    %c0_10 = arith.constant 0 : index
    %11 = vector.load %arg5[%c0_9, %c0_10] : memref<1x512xf32, #tpu.memory_space<vmem>>, vector<1x512xf32>
    %12 = vector.broadcast %11 : vector<1x512xf32> to vector<8x512xf32>
    %13 = arith.addf %10, %12 : vector<8x512xf32>
    %14 = vector.extract_strided_slice %13 {offsets = [0, 0], sizes = [8, 128], strides = [1, 1]} : vector<8x512xf32> to vector<8x128xf32>
    %cst_11 = arith.constant dense<0xFF800000> : vector<8xf32>
    %15 = vector.multi_reduction <maximumf>, %14, %cst_11 [1] : vector<8x128xf32> to vector<8xf32>
    %16 = vector.shape_cast %15 : vector<8xf32> to vector<8x1xf32>
    %17 = vector.broadcast %16 : vector<8x1xf32> to vector<8x128xf32>
    %18 = arith.subf %14, %17 : vector<8x128xf32>
    %19 = math.exp %18 : vector<8x128xf32>
    %20 = arith.truncf %19 : vector<8x128xf32> to vector<8x128xbf16>
    %21 = vector.extract_strided_slice %13 {offsets = [0, 128], sizes = [8, 128], strides = [1, 1]} : vector<8x512xf32> to vector<8x128xf32>
    %cst_12 = arith.constant dense<0xFF800000> : vector<8xf32>
    %22 = vector.multi_reduction <maximumf>, %21, %cst_12 [1] : vector<8x128xf32> to vector<8xf32>
    %23 = vector.shape_cast %22 : vector<8xf32> to vector<8x1xf32>
    %24 = vector.broadcast %23 : vector<8x1xf32> to vector<8x128xf32>
    %25 = arith.subf %21, %24 : vector<8x128xf32>
    %26 = math.exp %25 : vector<8x128xf32>
    %27 = arith.truncf %26 : vector<8x128xf32> to vector<8x128xbf16>
    %28 = vector.extract_strided_slice %13 {offsets = [0, 256], sizes = [8, 128], strides = [1, 1]} : vector<8x512xf32> to vector<8x128xf32>
    %cst_13 = arith.constant dense<0xFF800000> : vector<8xf32>
    %29 = vector.multi_reduction <maximumf>, %28, %cst_13 [1] : vector<8x128xf32> to vector<8xf32>
    %30 = vector.shape_cast %29 : vector<8xf32> to vector<8x1xf32>
    %31 = vector.broadcast %30 : vector<8x1xf32> to vector<8x128xf32>
    %32 = arith.subf %28, %31 : vector<8x128xf32>
    %33 = math.exp %32 : vector<8x128xf32>
    %34 = arith.truncf %33 : vector<8x128xf32> to vector<8x128xbf16>
    %35 = vector.extract_strided_slice %13 {offsets = [0, 384], sizes = [8, 128], strides = [1, 1]} : vector<8x512xf32> to vector<8x128xf32>
    %cst_14 = arith.constant dense<0xFF800000> : vector<8xf32>
    %36 = vector.multi_reduction <maximumf>, %35, %cst_14 [1] : vector<8x128xf32> to vector<8xf32>
    %37 = vector.shape_cast %36 : vector<8xf32> to vector<8x1xf32>
    %38 = vector.broadcast %37 : vector<8x1xf32> to vector<8x128xf32>
    %39 = arith.subf %35, %38 : vector<8x128xf32>
    %40 = math.exp %39 : vector<8x128xf32>
    %41 = arith.truncf %40 : vector<8x128xf32> to vector<8x128xbf16>
    %42 = tpu.concatenate %20, %27, %34, %41 in 1 : vector<8x128xbf16>, vector<8x128xbf16>, vector<8x128xbf16>, vector<8x128xbf16> -> vector<8x512xbf16>
    %c0_15 = arith.constant 0 : index
    %c0_16 = arith.constant 0 : index
    %43 = vector.load %arg6[%c0_15, %c0_16] : memref<512x256xbf16, #tpu.memory_space<vmem>>, vector<512x256xbf16>
    %cst_17 = arith.constant dense<0.000000e+00> : vector<8x256xf32>
    %44 = tpu.matmul %42, %43, %cst_17 {dimension_numbers = #tpu.dot_dimension_numbers<[1], [0], [0], [1], [0, 0, 1, 1], [], []>} : vector<8x512xbf16>, vector<512x256xbf16>, vector<8x256xf32> -> vector<8x256xf32>
    %45 = vector.extract_strided_slice %44 {offsets = [0, 0], sizes = [8, 128], strides = [1, 1]} : vector<8x256xf32> to vector<8x128xf32>
    %46 = vector.extract_strided_slice %44 {offsets = [0, 128], sizes = [8, 128], strides = [1, 1]} : vector<8x256xf32> to vector<8x128xf32>
    %47 = tpu.reciprocal %46 : vector<8x128xf32> -> vector<8x128xf32>
    %48 = arith.mulf %45, %47 : vector<8x128xf32>
    %c0_18 = arith.constant 0 : index
    %c0_19 = arith.constant 0 : index
    %49 = vector.load %arg7[%c0_18, %c0_19] : memref<8x128xf32, #tpu.memory_space<vmem>>, vector<8x128xf32>
    tpu.vector_store %arg7[%c0_18, %c0_19], %48 {strides = array<i32>} : memref<8x128xf32, #tpu.memory_space<vmem>>, vector<8x128xf32>,
    return
  }
  func.func @transform_0(%arg0: i32) -> (i32, i32) {
    %c0_i32 = arith.constant 0 : i32
    %c0_i32_0 = arith.constant 0 : i32
    return %arg0, %c0_i32 : i32, i32
  }
  func.func @transform_1(%arg0: i32) -> (i32, i32) {
    %c0_i32 = arith.constant 0 : i32
    %c0_i32_0 = arith.constant 0 : i32
    %c0_i32_1 = arith.constant 0 : i32
    return %c0_i32, %c0_i32_0 : i32, i32
  }
  func.func @transform_2(%arg0: i32) -> (i32, i32) {
    %c0_i32 = arith.constant 0 : i32
    %c0_i32_0 = arith.constant 0 : i32
    %c0_i32_1 = arith.constant 0 : i32
    return %c0_i32, %c0_i32_0 : i32, i32
  }
  func.func @transform_3(%arg0: i32) -> (i32, i32) {
    %c0_i32 = arith.constant 0 : i32
    %c0_i32_0 = arith.constant 0 : i32
    %c0_i32_1 = arith.constant 0 : i32
    return %c0_i32, %c0_i32_0 : i32, i32
  }
  func.func @transform_4(%arg0: i32) -> (i32, i32) {
    %c0_i32 = arith.constant 0 : i32
    %c0_i32_0 = arith.constant 0 : i32
    %c0_i32_1 = arith.constant 0 : i32
    return %c0_i32, %c0_i32_0 : i32, i32
  }
  func.func @transform_5(%arg0: i32) -> (i32, i32) {
    %c0_i32 = arith.constant 0 : i32
    %c0_i32_0 = arith.constant 0 : i32
    %c0_i32_1 = arith.constant 0 : i32
    return %c0_i32, %c0_i32_0 : i32, i32
  }
  func.func @transform_6(%arg0: i32) -> (i32, i32) {
    %c0_i32 = arith.constant 0 : i32
    %c0_i32_0 = arith.constant 0 : i32
    return %arg0, %c0_i32 : i32, i32
  }
}

</mosaic_0001>

<llo_original>
// kernel: tpu_custom_call.1
$region0: #{tpu_custom_call.1}
  #allocation0 [shape = 'u32[]', space=smem, size = 0x4, offset = 0x4, fixed_abs, tag = 'smem constant byte address 0x4 - core index']
  #allocation1 [shape = 'u32[144,128]{1,0:T(1,128)}', space=vmem, size = 0x12000, scoped, tag = 'internal scratch']
  %s0 = inlined_call_operand.hbm [shape: bf16[8,1024], index: 0, kind: input, shape index: {}]
  %s1 = inlined_call_operand.hbm [shape: bf16[1024,128], index: 1, kind: input, shape index: {}]
  %s2 = inlined_call_operand.vmem [shape: f32[1,128], index: 2, kind: input, shape index: {}]
  %s3 = inlined_call_operand.hbm [shape: bf16[128,512], index: 3, kind: input, shape index: {}]
  %s4 = inlined_call_operand.vmem [shape: f32[1,512], index: 4, kind: input, shape index: {}]
  %s5 = inlined_call_operand.hbm [shape: bf16[512,256], index: 5, kind: input, shape index: {}]
  %s6 = inlined_call_operand.hbm [shape: f32[8,128], index: 6, kind: output, shape index: {}]
  %s7 = sld [smem:[#allocation0]]
  $region50: #{tpu_custom_call.1} parent=0
    _
  %s9 = ssub.s32 1, %s7
  %s10 = scalar_select 0, %s9, %s7
  $region1: #{tpu_custom_call.1} parent=0
    #allocation2 [shape = 'u8[16384]{0}', space=vmem, size = 0x4000, scoped, tag = 'input window, operand 0, single buffered']
    #allocation3 [shape = 's32[1]{0}', space=sflag, size = 0x4, scoped, tag = 'scoped memory for tpu_custom_call.1']
    #allocation4 [shape = 's32[1]{0}', space=sflag, size = 0x4, scoped, tag = 'scoped memory for tpu_custom_call.1']
    #allocation5 [shape = 'u8[262144]{0}', space=vmem, size = 0x40000, scoped, tag = 'input window, operand 1, single buffered']
    #allocation6 [shape = 's32[1]{0}', space=sflag, size = 0x4, scoped, tag = 'scoped memory for tpu_custom_call.1']
    #allocation7 [shape = 'u8[131072]{0}', space=vmem, size = 0x20000, scoped, tag = 'input window, operand 3, single buffered']
    #allocation8 [shape = 'u8[262144]{0}', space=vmem, size = 0x40000, scoped, tag = 'input window, operand 5, single buffered']
    #allocation9 [shape = 's32[1]{0}', space=sflag, size = 0x4, scoped, tag = 'scoped memory for tpu_custom_call.1']
    #allocation10 [shape = 'u8[4096]{0}', space=vmem, size = 0x1000, scoped, tag = 'output window, operand 0, single buffered']
    %11 = vsyncpa [#allocation3], 0
    %12 = vsyncpa [#allocation6], 0
    %13 = vsyncpa [#allocation9], 0
    %14 = vsyncpa [#allocation4], 0
    // Predicated region
    $region2: #{tpu_custom_call.1} parent=1 // pred_check
      _
    $region3: #{tpu_custom_call.1} parent=1 // pred_check_branch
      %16 = sbr.rel (0) target = $region5
    $region4: #{tpu_custom_call.1} parent=1 // pred_region
      %s18 = ssub.s32 512, 512
      %19 = vsyncadd [#allocation3], %s18
      %s21 = sshll.u32 [#allocation2], 4
      %s22 = int_to_ptr.vmem [resolvable:$true] %s21
      %24 = dma.hbm_to_vmem [thread:$0]  %s0, 512, %s22, [#allocation3]
    $region5: #{tpu_custom_call.1} parent=1 // pred_fallthru
      _
    // Predicated region
    $region6: #{tpu_custom_call.1} parent=1 // pred_check
      _
    $region7: #{tpu_custom_call.1} parent=1 // pred_check_branch
      %26 = sbr.rel (0) target = $region9
    $region8: #{tpu_custom_call.1} parent=1 // pred_region
      %s28 = ssub.s32 8192, 8192
      %29 = vsyncadd [#allocation6], %s28
      %s30 = sshll.u32 [#allocation5], 4
      %s31 = int_to_ptr.vmem [resolvable:$true] %s30
      %36 = dma.hbm_to_vmem [thread:$0]  %s1, 8192, %s31, [#allocation6], 64, 64, 4
    $region9: #{tpu_custom_call.1} parent=1 // pred_fallthru
      _
    // Predicated region
    $region10: #{tpu_custom_call.1} parent=1 // pred_check
      _
    $region11: #{tpu_custom_call.1} parent=1 // pred_check_branch
      %38 = sbr.rel (0) target = $region13
    $region12: #{tpu_custom_call.1} parent=1 // pred_region
      _
    $region13: #{tpu_custom_call.1} parent=1 // pred_fallthru
      _
    // Predicated region
    $region14: #{tpu_custom_call.1} parent=1 // pred_check
      _
    $region15: #{tpu_custom_call.1} parent=1 // pred_check_branch
      %40 = sbr.rel (0) target = $region17
    $region16: #{tpu_custom_call.1} parent=1 // pred_region
      %s42 = ssub.s32 4096, 4096
      %43 = vsyncadd [#allocation6], %s42
      %s44 = sshll.u32 [#allocation7], 4
      %s45 = int_to_ptr.vmem [resolvable:$true] %s44
      %50 = dma.hbm_to_vmem [thread:$0]  %s3, 4096, %s45, [#allocation6], 256, 256, 16
    $region17: #{tpu_custom_call.1} parent=1 // pred_fallthru
      _
    // Predicated region
    $region18: #{tpu_custom_call.1} parent=1 // pred_check
      _
    $region19: #{tpu_custom_call.1} parent=1 // pred_check_branch
      %52 = sbr.rel (0) target = $region21
    $region20: #{tpu_custom_call.1} parent=1 // pred_region
      _
    $region21: #{tpu_custom_call.1} parent=1 // pred_fallthru
      _
    // Predicated region
    $region22: #{tpu_custom_call.1} parent=1 // pred_check
      _
    $region23: #{tpu_custom_call.1} parent=1 // pred_check_branch
      %54 = sbr.rel (0) target = $region25
    $region24: #{tpu_custom_call.1} parent=1 // pred_region
      %s56 = ssub.s32 8192, 8192
      %57 = vsyncadd [#allocation9], %s56
      %s58 = sshll.u32 [#allocation8], 4
      %s59 = int_to_ptr.vmem [resolvable:$true] %s58
      %64 = dma.hbm_to_vmem [thread:$0]  %s5, 8192, %s59, [#allocation9], 128, 128, 8
    $region25: #{tpu_custom_call.1} parent=1 // pred_fallthru
      _
    // Predicated region
    $region26: #{tpu_custom_call.1} parent=1 // pred_check
      _
    $region27: #{tpu_custom_call.1} parent=1 // pred_check_branch
      %66 = sbr.rel (0) target = $region29
    $region28: #{tpu_custom_call.1} parent=1 // pred_region
      %67 = dma.done [#allocation3], 512
    $region29: #{tpu_custom_call.1} parent=1 // pred_fallthru
      _
    // Predicated region
    $region30: #{tpu_custom_call.1} parent=1 // pred_check
      _
    $region31: #{tpu_custom_call.1} parent=1 // pred_check_branch
      %69 = sbr.rel (0) target = $region33
    $region32: #{tpu_custom_call.1} parent=1 // pred_region
      %70 = dma.done [#allocation6], 8192
    $region33: #{tpu_custom_call.1} parent=1 // pred_fallthru
      _
    // Predicated region
    $region34: #{tpu_custom_call.1} parent=1 // pred_check
      _
    $region35: #{tpu_custom_call.1} parent=1 // pred_check_branch
      %72 = sbr.rel (0) target = $region37
    $region36: #{tpu_custom_call.1} parent=1 // pred_region
      %73 = dma.done [#allocation6], 4096
    $region37: #{tpu_custom_call.1} parent=1 // pred_fallthru
      _
    // Predicated region
    $region38: #{tpu_custom_call.1} parent=1 // pred_check
      _
    $region39: #{tpu_custom_call.1} parent=1 // pred_check_branch
      %75 = sbr.rel (0) target = $region41
    $region40: #{tpu_custom_call.1} parent=1 // pred_region
      %76 = dma.done [#allocation9], 8192
    $region41: #{tpu_custom_call.1} parent=1 // pred_fallthru
      _
    %v78 = vld [vmem:[#allocation2] sm:$0xff]
    %v79 = vld [vmem:[#allocation2 + $0x8] sm:$0xff]
    %v80 = vld [vmem:[#allocation2 + $0x10] sm:$0xff]
    %v81 = vld [vmem:[#allocation2 + $0x18] sm:$0xff]
    %v82 = vld [vmem:[#allocation5] sm:$0xf]
    %v83 = vld [vmem:[#allocation5 + $0x4] sm:$0xf]
    %v84 = vld [vmem:[#allocation5 + $0x8] sm:$0xf]
    %v85 = vld [vmem:[#allocation5 + $0xc] sm:$0xf]
    %v86 = vld [vmem:[#allocation5 + $0x10] sm:$0xf]
    %v87 = vld [vmem:[#allocation5 + $0x14] sm:$0xf]
    %v88 = vld [vmem:[#allocation5 + $0x18] sm:$0xf]
    %v89 = vld [vmem:[#allocation5 + $0x1c] sm:$0xf]
    %v90 = vld [vmem:[#allocation5 + $0x20] sm:$0xf]
    %v91 = vld [vmem:[#allocation5 + $0x24] sm:$0xf]
    %v92 = vld [vmem:[#allocation5 + $0x28] sm:$0xf]
    %v93 = vld [vmem:[#allocation5 + $0x2c] sm:$0xf]
    %v94 = vld [vmem:[#allocation5 + $0x30] sm:$0xf]
    %v95 = vld [vmem:[#allocation5 + $0x34] sm:$0xf]
    %v96 = vld [vmem:[#allocation5 + $0x38] sm:$0xf]
    %v97 = vld [vmem:[#allocation5 + $0x3c] sm:$0xf]
    %v98 = vld [vmem:[#allocation5 + $0x40] sm:$0xf]
    %v99 = vld [vmem:[#allocation5 + $0x44] sm:$0xf]
    %v100 = vld [vmem:[#allocation5 + $0x48] sm:$0xf]
    %v101 = vld [vmem:[#allocation5 + $0x4c] sm:$0xf]
    %v102 = vld [vmem:[#allocation5 + $0x50] sm:$0xf]
    %v103 = vld [vmem:[#allocation5 + $0x54] sm:$0xf]
    %v104 = vld [vmem:[#allocation5 + $0x58] sm:$0xf]
    %v105 = vld [vmem:[#allocation5 + $0x5c] sm:$0xf]
    %v106 = vld [vmem:[#allocation5 + $0x60] sm:$0xf]
    %v107 = vld [vmem:[#allocation5 + $0x64] sm:$0xf]
    %v108 = vld [vmem:[#allocation5 + $0x68] sm:$0xf]
    %v109 = vld [vmem:[#allocation5 + $0x6c] sm:$0xf]
    %v110 = vld [vmem:[#allocation5 + $0x70] sm:$0xf]
    %v111 = vld [vmem:[#allocation5 + $0x74] sm:$0xf]
    %v112 = vld [vmem:[#allocation5 + $0x78] sm:$0xf]
    %v113 = vld [vmem:[#allocation5 + $0x7c] sm:$0xf]
    %v114 = vld [vmem:[#allocation5 + $0x80] sm:$0xf]
    %v115 = vld [vmem:[#allocation5 + $0x84] sm:$0xf]
    %v116 = vld [vmem:[#allocation5 + $0x88] sm:$0xf]
    %v117 = vld [vmem:[#allocation5 + $0x8c] sm:$0xf]
    %v118 = vld [vmem:[#allocation5 + $0x90] sm:$0xf]
    %v119 = vld [vmem:[#allocation5 + $0x94] sm:$0xf]
    %v120 = vld [vmem:[#allocation5 + $0x98] sm:$0xf]
    %v121 = vld [vmem:[#allocation5 + $0x9c] sm:$0xf]
    %v122 = vld [vmem:[#allocation5 + $0xa0] sm:$0xf]
    %v123 = vld [vmem:[#allocation5 + $0xa4] sm:$0xf]
    %v124 = vld [vmem:[#allocation5 + $0xa8] sm:$0xf]
    %v125 = vld [vmem:[#allocation5 + $0xac] sm:$0xf]
    %v126 = vld [vmem:[#allocation5 + $0xb0] sm:$0xf]
    %v127 = vld [vmem:[#allocation5 + $0xb4] sm:$0xf]
    %v128 = vld [vmem:[#allocation5 + $0xb8] sm:$0xf]
    %v129 = vld [vmem:[#allocation5 + $0xbc] sm:$0xf]
    %v130 = vld [vmem:[#allocation5 + $0xc0] sm:$0xf]
    %v131 = vld [vmem:[#allocation5 + $0xc4] sm:$0xf]
    %v132 = vld [vmem:[#allocation5 + $0xc8] sm:$0xf]
    %v133 = vld [vmem:[#allocation5 + $0xcc] sm:$0xf]
    %v134 = vld [vmem:[#allocation5 + $0xd0] sm:$0xf]
    %v135 = vld [vmem:[#allocation5 + $0xd4] sm:$0xf]
    %v136 = vld [vmem:[#allocation5 + $0xd8] sm:$0xf]
    %v137 = vld [vmem:[#allocation5 + $0xdc] sm:$0xf]
    %v138 = vld [vmem:[#allocation5 + $0xe0] sm:$0xf]
    %v139 = vld [vmem:[#allocation5 + $0xe4] sm:$0xf]
    %v140 = vld [vmem:[#allocation5 + $0xe8] sm:$0xf]
    %v141 = vld [vmem:[#allocation5 + $0xec] sm:$0xf]
    %v142 = vld [vmem:[#allocation5 + $0xf0] sm:$0xf]
    %v143 = vld [vmem:[#allocation5 + $0xf4] sm:$0xf]
    %v144 = vld [vmem:[#allocation5 + $0xf8] sm:$0xf]
    %v145 = vld [vmem:[#allocation5 + $0xfc] sm:$0xf]
    %v146 = vld [vmem:[#allocation5 + $0x100] sm:$0xf]
    %v147 = vld [vmem:[#allocation5 + $0x104] sm:$0xf]
    %v148 = vld [vmem:[#allocation5 + $0x108] sm:$0xf]
    %v149 = vld [vmem:[#allocation5 + $0x10c] sm:$0xf]
    %v150 = vld [vmem:[#allocation5 + $0x110] sm:$0xf]
    %v151 = vld [vmem:[#allocation5 + $0x114] sm:$0xf]
    %v152 = vld [vmem:[#allocation5 + $0x118] sm:$0xf]
    %v153 = vld [vmem:[#allocation5 + $0x11c] sm:$0xf]
    %v154 = vld [vmem:[#allocation5 + $0x120] sm:$0xf]
    %v155 = vld [vmem:[#allocation5 + $0x124] sm:$0xf]
    %v156 = vld [vmem:[#allocation5 + $0x128] sm:$0xf]
    %v157 = vld [vmem:[#allocation5 + $0x12c] sm:$0xf]
    %v158 = vld [vmem:[#allocation5 + $0x130] sm:$0xf]
    %v159 = vld [vmem:[#allocation5 + $0x134] sm:$0xf]
    %v160 = vld [vmem:[#allocation5 + $0x138] sm:$0xf]
    %v161 = vld [vmem:[#allocation5 + $0x13c] sm:$0xf]
    %v162 = vld [vmem:[#allocation5 + $0x140] sm:$0xf]
    %v163 = vld [vmem:[#allocation5 + $0x144] sm:$0xf]
    %v164 = vld [vmem:[#allocation5 + $0x148] sm:$0xf]
    %v165 = vld [vmem:[#allocation5 + $0x14c] sm:$0xf]
    %v166 = vld [vmem:[#allocation5 + $0x150] sm:$0xf]
    %v167 = vld [vmem:[#allocation5 + $0x154] sm:$0xf]
    %v168 = vld [vmem:[#allocation5 + $0x158] sm:$0xf]
    %v169 = vld [vmem:[#allocation5 + $0x15c] sm:$0xf]
    %v170 = vld [vmem:[#allocation5 + $0x160] sm:$0xf]
    %v171 = vld [vmem:[#allocation5 + $0x164] sm:$0xf]
    %v172 = vld [vmem:[#allocation5 + $0x168] sm:$0xf]
    %v173 = vld [vmem:[#allocation5 + $0x16c] sm:$0xf]
    %v174 = vld [vmem:[#allocation5 + $0x170] sm:$0xf]
    %v175 = vld [vmem:[#allocation5 + $0x174] sm:$0xf]
    %v176 = vld [vmem:[#allocation5 + $0x178] sm:$0xf]
    %v177 = vld [vmem:[#allocation5 + $0x17c] sm:$0xf]
    %v178 = vld [vmem:[#allocation5 + $0x180] sm:$0xf]
    %v179 = vld [vmem:[#allocation5 + $0x184] sm:$0xf]
    %v180 = vld [vmem:[#allocation5 + $0x188] sm:$0xf]
    %v181 = vld [vmem:[#allocation5 + $0x18c] sm:$0xf]
    %v182 = vld [vmem:[#allocation5 + $0x190] sm:$0xf]
    %v183 = vld [vmem:[#allocation5 + $0x194] sm:$0xf]
    %v184 = vld [vmem:[#allocation5 + $0x198] sm:$0xf]
    %v185 = vld [vmem:[#allocation5 + $0x19c] sm:$0xf]
    %v186 = vld [vmem:[#allocation5 + $0x1a0] sm:$0xf]
    %v187 = vld [vmem:[#allocation5 + $0x1a4] sm:$0xf]
    %v188 = vld [vmem:[#allocation5 + $0x1a8] sm:$0xf]
    %v189 = vld [vmem:[#allocation5 + $0x1ac] sm:$0xf]
    %v190 = vld [vmem:[#allocation5 + $0x1b0] sm:$0xf]
    %v191 = vld [vmem:[#allocation5 + $0x1b4] sm:$0xf]
    %v192 = vld [vmem:[#allocation5 + $0x1b8] sm:$0xf]
    %v193 = vld [vmem:[#allocation5 + $0x1bc] sm:$0xf]
    %v194 = vld [vmem:[#allocation5 + $0x1c0] sm:$0xf]
    %v195 = vld [vmem:[#allocation5 + $0x1c4] sm:$0xf]
    %v196 = vld [vmem:[#allocation5 + $0x1c8] sm:$0xf]
    %v197 = vld [vmem:[#allocation5 + $0x1cc] sm:$0xf]
    %v198 = vld [vmem:[#allocation5 + $0x1d0] sm:$0xf]
    %v199 = vld [vmem:[#allocation5 + $0x1d4] sm:$0xf]
    %v200 = vld [vmem:[#allocation5 + $0x1d8] sm:$0xf]
    %v201 = vld [vmem:[#allocation5 + $0x1dc] sm:$0xf]
    %v202 = vld [vmem:[#allocation5 + $0x1e0] sm:$0xf]
    %v203 = vld [vmem:[#allocation5 + $0x1e4] sm:$0xf]
    %v204 = vld [vmem:[#allocation5 + $0x1e8] sm:$0xf]
    %v205 = vld [vmem:[#allocation5 + $0x1ec] sm:$0xf]
    %v206 = vld [vmem:[#allocation5 + $0x1f0] sm:$0xf]
    %v207 = vld [vmem:[#allocation5 + $0x1f4] sm:$0xf]
    %v208 = vld [vmem:[#allocation5 + $0x1f8] sm:$0xf]
    %v209 = vld [vmem:[#allocation5 + $0x1fc] sm:$0xf]
    %v210 = vld [vmem:[%s2] sm:$0x1]
    %v212 = vlaneseq
    %v213 = vshrl.u32 %v212, 7
    %v214 = vsub.s32 0, %v213
    %v215 = vrot.slane %v210, %v214
    %v221 = vunpack.c.l.b16 %v78
    %v222 = vunpack.c.h.b16 %v78
    %v223 = vunpack.c.l.b16 %v79
    %v224 = vunpack.c.h.b16 %v79
    %v225 = vunpack.c.l.b16 %v80
    %v226 = vunpack.c.h.b16 %v80
    %v227 = vunpack.c.l.b16 %v81
    %v228 = vunpack.c.h.b16 %v81
    %v229 = vpack.c.b16 %v221, %v221
    %v230 = vpack.c.b16 %v222, %v222
    %v231 = vpack.c.b16 %v223, %v223
    %v232 = vpack.c.b16 %v224, %v224
    %v233 = vpack.c.b16 %v225, %v225
    %v234 = vpack.c.b16 %v226, %v226
    %v235 = vpack.c.b16 %v227, %v227
    %v236 = vpack.c.b16 %v228, %v228
    %v373 = vunpack.c.l.b16 %v82
    %v374 = vunpack.c.l.b16 %v83
    %v375 = vunpack.c.l.b16 %v84
    %v376 = vunpack.c.l.b16 %v85
    %v377 = vunpack.c.l.b16 %v86
    %v378 = vunpack.c.l.b16 %v87
    %v379 = vunpack.c.l.b16 %v88
    %v380 = vunpack.c.l.b16 %v89
    %v381 = vunpack.c.l.b16 %v90
    %v382 = vunpack.c.l.b16 %v91
    %v383 = vunpack.c.l.b16 %v92
    %v384 = vunpack.c.l.b16 %v93
    %v385 = vunpack.c.l.b16 %v94
    %v386 = vunpack.c.l.b16 %v95
    %v387 = vunpack.c.l.b16 %v96
    %v388 = vunpack.c.l.b16 %v97
    %v389 = vunpack.c.l.b16 %v98
    %v390 = vunpack.c.l.b16 %v99
    %v391 = vunpack.c.l.b16 %v100
    %v392 = vunpack.c.l.b16 %v101
    %v393 = vunpack.c.l.b16 %v102
    %v394 = vunpack.c.l.b16 %v103
    %v395 = vunpack.c.l.b16 %v104
    %v396 = vunpack.c.l.b16 %v105
    %v397 = vunpack.c.l.b16 %v106
    %v398 = vunpack.c.l.b16 %v107
    %v399 = vunpack.c.l.b16 %v108
    %v400 = vunpack.c.l.b16 %v109
    %v401 = vunpack.c.l.b16 %v110
    %v402 = vunpack.c.l.b16 %v111
    %v403 = vunpack.c.l.b16 %v112
    %v404 = vunpack.c.l.b16 %v113
    %v405 = vunpack.c.l.b16 %v114
    %v406 = vunpack.c.l.b16 %v115
    %v407 = vunpack.c.l.b16 %v116
    %v408 = vunpack.c.l.b16 %v117
    %v409 = vunpack.c.l.b16 %v118
    %v410 = vunpack.c.l.b16 %v119
    %v411 = vunpack.c.l.b16 %v120
    %v412 = vunpack.c.l.b16 %v121
    %v413 = vunpack.c.l.b16 %v122
    %v414 = vunpack.c.l.b16 %v123
    %v415 = vunpack.c.l.b16 %v124
    %v416 = vunpack.c.l.b16 %v125
    %v417 = vunpack.c.l.b16 %v126
    %v418 = vunpack.c.l.b16 %v127
    %v419 = vunpack.c.l.b16 %v128
    %v420 = vunpack.c.l.b16 %v129
    %v421 = vunpack.c.l.b16 %v130
    %v422 = vunpack.c.l.b16 %v131
    %v423 = vunpack.c.l.b16 %v132
    %v424 = vunpack.c.l.b16 %v133
    %v425 = vunpack.c.l.b16 %v134
    %v426 = vunpack.c.l.b16 %v135
    %v427 = vunpack.c.l.b16 %v136
    %v428 = vunpack.c.l.b16 %v137
    %v429 = vunpack.c.l.b16 %v138
    %v430 = vunpack.c.l.b16 %v139
    %v431 = vunpack.c.l.b16 %v140
    %v432 = vunpack.c.l.b16 %v141
    %v433 = vunpack.c.l.b16 %v142
    %v434 = vunpack.c.l.b16 %v143
    %v435 = vunpack.c.l.b16 %v144
    %v436 = vunpack.c.l.b16 %v145
    %v437 = vunpack.c.l.b16 %v146
    %v438 = vunpack.c.l.b16 %v147
    %v439 = vunpack.c.l.b16 %v148
    %v440 = vunpack.c.l.b16 %v149
    %v441 = vunpack.c.l.b16 %v150
    %v442 = vunpack.c.l.b16 %v151
    %v443 = vunpack.c.l.b16 %v152
    %v444 = vunpack.c.l.b16 %v153
    %v445 = vunpack.c.l.b16 %v154
    %v446 = vunpack.c.l.b16 %v155
    %v447 = vunpack.c.l.b16 %v156
    %v448 = vunpack.c.l.b16 %v157
    %v449 = vunpack.c.l.b16 %v158
    %v450 = vunpack.c.l.b16 %v159
    %v451 = vunpack.c.l.b16 %v160
    %v452 = vunpack.c.l.b16 %v161
    %v453 = vunpack.c.l.b16 %v162
    %v454 = vunpack.c.l.b16 %v163
    %v455 = vunpack.c.l.b16 %v164
    %v456 = vunpack.c.l.b16 %v165
    %v457 = vunpack.c.l.b16 %v166
    %v458 = vunpack.c.l.b16 %v167
    %v459 = vunpack.c.l.b16 %v168
    %v460 = vunpack.c.l.b16 %v169
    %v461 = vunpack.c.l.b16 %v170
    %v462 = vunpack.c.l.b16 %v171
    %v463 = vunpack.c.l.b16 %v172
    %v464 = vunpack.c.l.b16 %v173
    %v465 = vunpack.c.l.b16 %v174
    %v466 = vunpack.c.l.b16 %v175
    %v467 = vunpack.c.l.b16 %v176
    %v468 = vunpack.c.l.b16 %v177
    %v469 = vunpack.c.l.b16 %v178
    %v470 = vunpack.c.l.b16 %v179
    %v471 = vunpack.c.l.b16 %v180
    %v472 = vunpack.c.l.b16 %v181
    %v473 = vunpack.c.l.b16 %v182
    %v474 = vunpack.c.l.b16 %v183
    %v475 = vunpack.c.l.b16 %v184
    %v476 = vunpack.c.l.b16 %v185
    %v477 = vunpack.c.l.b16 %v186
    %v478 = vunpack.c.l.b16 %v187
    %v479 = vunpack.c.l.b16 %v188
    %v480 = vunpack.c.l.b16 %v189
    %v481 = vunpack.c.l.b16 %v190
    %v482 = vunpack.c.l.b16 %v191
    %v483 = vunpack.c.l.b16 %v192
    %v484 = vunpack.c.l.b16 %v193
    %v485 = vunpack.c.l.b16 %v194
    %v486 = vunpack.c.l.b16 %v195
    %v487 = vunpack.c.l.b16 %v196
    %v488 = vunpack.c.l.b16 %v197
    %v489 = vunpack.c.l.b16 %v198
    %v490 = vunpack.c.l.b16 %v199
    %v491 = vunpack.c.l.b16 %v200
    %v492 = vunpack.c.l.b16 %v201
    %v493 = vunpack.c.l.b16 %v202
    %v494 = vunpack.c.l.b16 %v203
    %v495 = vunpack.c.l.b16 %v204
    %v496 = vunpack.c.l.b16 %v205
    %v497 = vunpack.c.l.b16 %v206
    %v498 = vunpack.c.l.b16 %v207
    %v499 = vunpack.c.l.b16 %v208
    %v500 = vunpack.c.l.b16 %v209
    %v501 = vpack.c.b16 %v374, %v373
    %v502 = vpack.c.b16 %v376, %v375
    %v503 = vpack.c.b16 %v378, %v377
    %v504 = vpack.c.b16 %v380, %v379
    %v505 = vpack.c.b16 %v382, %v381
    %v506 = vpack.c.b16 %v384, %v383
    %v507 = vpack.c.b16 %v386, %v385
    %v508 = vpack.c.b16 %v388, %v387
    %v509 = vpack.c.b16 %v390, %v389
    %v510 = vpack.c.b16 %v392, %v391
    %v511 = vpack.c.b16 %v394, %v393
    %v512 = vpack.c.b16 %v396, %v395
    %v513 = vpack.c.b16 %v398, %v397
    %v514 = vpack.c.b16 %v400, %v399
    %v515 = vpack.c.b16 %v402, %v401
    %v516 = vpack.c.b16 %v404, %v403
    %v517 = vpack.c.b16 %v406, %v405
    %v518 = vpack.c.b16 %v408, %v407
    %v519 = vpack.c.b16 %v410, %v409
    %v520 = vpack.c.b16 %v412, %v411
    %v521 = vpack.c.b16 %v414, %v413
    %v522 = vpack.c.b16 %v416, %v415
    %v523 = vpack.c.b16 %v418, %v417
    %v524 = vpack.c.b16 %v420, %v419
    %v525 = vpack.c.b16 %v422, %v421
    %v526 = vpack.c.b16 %v424, %v423
    %v527 = vpack.c.b16 %v426, %v425
    %v528 = vpack.c.b16 %v428, %v427
    %v529 = vpack.c.b16 %v430, %v429
    %v530 = vpack.c.b16 %v432, %v431
    %v531 = vpack.c.b16 %v434, %v433
    %v532 = vpack.c.b16 %v436, %v435
    %v533 = vpack.c.b16 %v438, %v437
    %v534 = vpack.c.b16 %v440, %v439
    %v535 = vpack.c.b16 %v442, %v441
    %v536 = vpack.c.b16 %v444, %v443
    %v537 = vpack.c.b16 %v446, %v445
    %v538 = vpack.c.b16 %v448, %v447
    %v539 = vpack.c.b16 %v450, %v449
    %v540 = vpack.c.b16 %v452, %v451
    %v541 = vpack.c.b16 %v454, %v453
    %v542 = vpack.c.b16 %v456, %v455
    %v543 = vpack.c.b16 %v458, %v457
    %v544 = vpack.c.b16 %v460, %v459
    %v545 = vpack.c.b16 %v462, %v461
    %v546 = vpack.c.b16 %v464, %v463
    %v547 = vpack.c.b16 %v466, %v465
    %v548 = vpack.c.b16 %v468, %v467
    %v549 = vpack.c.b16 %v470, %v469
    %v550 = vpack.c.b16 %v472, %v471
    %v551 = vpack.c.b16 %v474, %v473
    %v552 = vpack.c.b16 %v476, %v475
    %v553 = vpack.c.b16 %v478, %v477
    %v554 = vpack.c.b16 %v480, %v479
    %v555 = vpack.c.b16 %v482, %v481
    %v556 = vpack.c.b16 %v484, %v483
    %v557 = vpack.c.b16 %v486, %v485
    %v558 = vpack.c.b16 %v488, %v487
    %v559 = vpack.c.b16 %v490, %v489
    %v560 = vpack.c.b16 %v492, %v491
    %v561 = vpack.c.b16 %v494, %v493
    %v562 = vpack.c.b16 %v496, %v495
    %v563 = vpack.c.b16 %v498, %v497
    %v564 = vpack.c.b16 %v500, %v499
    %629 = vmatprep.subr.bf16.mxu0 0
    %630 = vmatpush1.bf16.msra.mxu0 %v501
    %631 = vmatprep.subr.bf16.mxu0 0
    %632 = vmatpush1.bf16.msra.mxu0 %v502
    %633 = vmatprep.subr.bf16.mxu0 0
    %634 = vmatpush1.bf16.msra.mxu0 %v503
    %635 = vmatprep.subr.bf16.mxu0 0
    %636 = vmatpush1.bf16.msra.mxu0 %v504
    %637 = vmatprep.subr.bf16.mxu0 0
    %638 = vmatpush1.bf16.msra.mxu0 %v505
    %639 = vmatprep.subr.bf16.mxu0 0
    %640 = vmatpush1.bf16.msra.mxu0 %v506
    %641 = vmatprep.subr.bf16.mxu0 0
    %642 = vmatpush1.bf16.msra.mxu0 %v507
    %643 = vmatprep.subr.bf16.mxu0 0
    %644 = vmatpush1.bf16.msra.mxu0 %v508
    %645 = vmatprep.subr.bf16.mxu0 0
    %646 = vmatpush1.bf16.msra.mxu0 %v509
    %647 = vmatprep.subr.bf16.mxu0 0
    %648 = vmatpush1.bf16.msra.mxu0 %v510
    %649 = vmatprep.subr.bf16.mxu0 0
    %650 = vmatpush1.bf16.msra.mxu0 %v511
    %651 = vmatprep.subr.bf16.mxu0 0
    %652 = vmatpush1.bf16.msra.mxu0 %v512
    %653 = vmatprep.subr.bf16.mxu0 0
    %654 = vmatpush1.bf16.msra.mxu0 %v513
    %655 = vmatprep.subr.bf16.mxu0 0
    %656 = vmatpush1.bf16.msra.mxu0 %v514
    %657 = vmatprep.subr.bf16.mxu0 0
    %658 = vmatpush1.bf16.msra.mxu0 %v515
    %659 = vmatprep.subr.bf16.mxu0 0
    %660 = vmatpush1.bf16.msra.mxu0 %v516
    %661 = vmatprep.mubr.bf16.mxu0 %v230
    %662 = vmatmul.mubr.bf16.gmra.mrb[0].mxu0 %v229
    %v663 = vpop.f32.mrb[0].mxu0
    %v664 = vadd.f32 %v215, %v663
    %v665 = vpop.f32.mrb[0].mxu0
    %v666 = vpop.f32.mrb[0].mxu0
    %v667 = vpop.f32.mrb[0].mxu0
    %668 = vdwg.mxu0
    %669 = vmatprep.subr.bf16.mxu0 0
    %670 = vmatpush1.bf16.msra.mxu0 %v517
    %671 = vmatprep.subr.bf16.mxu0 0
    %672 = vmatpush1.bf16.msra.mxu0 %v518
    %673 = vmatprep.subr.bf16.mxu0 0
    %674 = vmatpush1.bf16.msra.mxu0 %v519
    %675 = vmatprep.subr.bf16.mxu0 0
    %676 = vmatpush1.bf16.msra.mxu0 %v520
    %677 = vmatprep.subr.bf16.mxu0 0
    %678 = vmatpush1.bf16.msra.mxu0 %v521
    %679 = vmatprep.subr.bf16.mxu0 0
    %680 = vmatpush1.bf16.msra.mxu0 %v522
    %681 = vmatprep.subr.bf16.mxu0 0
    %682 = vmatpush1.bf16.msra.mxu0 %v523
    %683 = vmatprep.subr.bf16.mxu0 0
    %684 = vmatpush1.bf16.msra.mxu0 %v524
    %685 = vmatprep.subr.bf16.mxu0 0
    %686 = vmatpush1.bf16.msra.mxu0 %v525
    %687 = vmatprep.subr.bf16.mxu0 0
    %688 = vmatpush1.bf16.msra.mxu0 %v526
    %689 = vmatprep.subr.bf16.mxu0 0
    %690 = vmatpush1.bf16.msra.mxu0 %v527
    %691 = vmatprep.subr.bf16.mxu0 0
    %692 = vmatpush1.bf16.msra.mxu0 %v528
    %693 = vmatprep.subr.bf16.mxu0 0
    %694 = vmatpush1.bf16.msra.mxu0 %v529
    %695 = vmatprep.subr.bf16.mxu0 0
    %696 = vmatpush1.bf16.msra.mxu0 %v530
    %697 = vmatprep.subr.bf16.mxu0 0
    %698 = vmatpush1.bf16.msra.mxu0 %v531
    %699 = vmatprep.subr.bf16.mxu0 0
    %700 = vmatpush1.bf16.msra.mxu0 %v532
    %701 = vmatprep.mubr.bf16.mxu0 %v232
    %702 = vmatmul.mubr.bf16.gmra.mrb[0].mxu0 %v231
    %v703 = vpop.f32.mrb[0].mxu0
    %v704 = vadd.f32 %v664, %v703
    %v705 = vpop.f32.mrb[0].mxu0
    %v706 = vpop.f32.mrb[0].mxu0
    %v707 = vpop.f32.mrb[0].mxu0
    %708 = vdwg.mxu0
    %709 = vmatprep.subr.bf16.mxu0 0
    %710 = vmatpush1.bf16.msra.mxu0 %v533
    %711 = vmatprep.subr.bf16.mxu0 0
    %712 = vmatpush1.bf16.msra.mxu0 %v534
    %713 = vmatprep.subr.bf16.mxu0 0
    %714 = vmatpush1.bf16.msra.mxu0 %v535
    %715 = vmatprep.subr.bf16.mxu0 0
    %716 = vmatpush1.bf16.msra.mxu0 %v536
    %717 = vmatprep.subr.bf16.mxu0 0
    %718 = vmatpush1.bf16.msra.mxu0 %v537
    %719 = vmatprep.subr.bf16.mxu0 0
    %720 = vmatpush1.bf16.msra.mxu0 %v538
    %721 = vmatprep.subr.bf16.mxu0 0
    %722 = vmatpush1.bf16.msra.mxu0 %v539
    %723 = vmatprep.subr.bf16.mxu0 0
    %724 = vmatpush1.bf16.msra.mxu0 %v540
    %725 = vmatprep.subr.bf16.mxu0 0
    %726 = vmatpush1.bf16.msra.mxu0 %v541
    %727 = vmatprep.subr.bf16.mxu0 0
    %728 = vmatpush1.bf16.msra.mxu0 %v542
    %729 = vmatprep.subr.bf16.mxu0 0
    %730 = vmatpush1.bf16.msra.mxu0 %v543
    %731 = vmatprep.subr.bf16.mxu0 0
    %732 = vmatpush1.bf16.msra.mxu0 %v544
    %733 = vmatprep.subr.bf16.mxu0 0
    %734 = vmatpush1.bf16.msra.mxu0 %v545
    %735 = vmatprep.subr.bf16.mxu0 0
    %736 = vmatpush1.bf16.msra.mxu0 %v546
    %737 = vmatprep.subr.bf16.mxu0 0
    %738 = vmatpush1.bf16.msra.mxu0 %v547
    %739 = vmatprep.subr.bf16.mxu0 0
    %740 = vmatpush1.bf16.msra.mxu0 %v548
    %741 = vmatprep.mubr.bf16.mxu0 %v234
    %742 = vmatmul.mubr.bf16.gmra.mrb[0].mxu0 %v233
    %v743 = vpop.f32.mrb[0].mxu0
    %v744 = vadd.f32 %v704, %v743
    %v745 = vpop.f32.mrb[0].mxu0
    %v746 = vpop.f32.mrb[0].mxu0
    %v747 = vpop.f32.mrb[0].mxu0
    %748 = vdwg.mxu0
    %749 = vmatprep.subr.bf16.mxu0 0
    %750 = vmatpush1.bf16.msra.mxu0 %v549
    %751 = vmatprep.subr.bf16.mxu0 0
    %752 = vmatpush1.bf16.msra.mxu0 %v550
    %753 = vmatprep.subr.bf16.mxu0 0
    %754 = vmatpush1.bf16.msra.mxu0 %v551
    %755 = vmatprep.subr.bf16.mxu0 0
    %756 = vmatpush1.bf16.msra.mxu0 %v552
    %757 = vmatprep.subr.bf16.mxu0 0
    %758 = vmatpush1.bf16.msra.mxu0 %v553
    %759 = vmatprep.subr.bf16.mxu0 0
    %760 = vmatpush1.bf16.msra.mxu0 %v554
    %761 = vmatprep.subr.bf16.mxu0 0
    %762 = vmatpush1.bf16.msra.mxu0 %v555
    %763 = vmatprep.subr.bf16.mxu0 0
    %764 = vmatpush1.bf16.msra.mxu0 %v556
    %765 = vmatprep.subr.bf16.mxu0 0
    %766 = vmatpush1.bf16.msra.mxu0 %v557
    %767 = vmatprep.subr.bf16.mxu0 0
    %768 = vmatpush1.bf16.msra.mxu0 %v558
    %769 = vmatprep.subr.bf16.mxu0 0
    %770 = vmatpush1.bf16.msra.mxu0 %v559
    %771 = vmatprep.subr.bf16.mxu0 0
    %772 = vmatpush1.bf16.msra.mxu0 %v560
    %773 = vmatprep.subr.bf16.mxu0 0
    %774 = vmatpush1.bf16.msra.mxu0 %v561
    %775 = vmatprep.subr.bf16.mxu0 0
    %776 = vmatpush1.bf16.msra.mxu0 %v562
    %777 = vmatprep.subr.bf16.mxu0 0
    %778 = vmatpush1.bf16.msra.mxu0 %v563
    %779 = vmatprep.subr.bf16.mxu0 0
    %780 = vmatpush1.bf16.msra.mxu0 %v564
    %781 = vmatprep.mubr.bf16.mxu0 %v236
    %782 = vmatmul.mubr.bf16.gmra.mrb[0].mxu0 %v235
    %v783 = vpop.f32.mrb[0].mxu0
    %v784 = vadd.f32 %v744, %v783
    %v785 = vpop.f32.mrb[0].mxu0
    %v786 = vpop.f32.mrb[0].mxu0
    %v787 = vpop.f32.mrb[0].mxu0
    %788 = vdwg.mxu0
    %v789 = vmax.f32 %v784, 0.0
    %v790 = vpack.c.bf16 %v789, %v789
    %v791 = vld [vmem:[#allocation7] sm:$0xff]
    %v792 = vld [vmem:[#allocation7 + $0x8] sm:$0xff]
    %v793 = vld [vmem:[#allocation7 + $0x10] sm:$0xff]
    %v794 = vld [vmem:[#allocation7 + $0x18] sm:$0xff]
    %v795 = vld [vmem:[#allocation7 + $0x20] sm:$0xff]
    %v796 = vld [vmem:[#allocation7 + $0x28] sm:$0xff]
    %v797 = vld [vmem:[#allocation7 + $0x30] sm:$0xff]
    %v798 = vld [vmem:[#allocation7 + $0x38] sm:$0xff]
    %v799 = vld [vmem:[#allocation7 + $0x40] sm:$0xff]
    %v800 = vld [vmem:[#allocation7 + $0x48] sm:$0xff]
    %v801 = vld [vmem:[#allocation7 + $0x50] sm:$0xff]
    %v802 = vld [vmem:[#allocation7 + $0x58] sm:$0xff]
    %v803 = vld [vmem:[#allocation7 + $0x60] sm:$0xff]
    %v804 = vld [vmem:[#allocation7 + $0x68] sm:$0xff]
    %v805 = vld [vmem:[#allocation7 + $0x70] sm:$0xff]
    %v806 = vld [vmem:[#allocation7 + $0x78] sm:$0xff]
    %v807 = vld [vmem:[#allocation7 + $0x80] sm:$0xff]
    %v808 = vld [vmem:[#allocation7 + $0x88] sm:$0xff]
    %v809 = vld [vmem:[#allocation7 + $0x90] sm:$0xff]
    %v810 = vld [vmem:[#allocation7 + $0x98] sm:$0xff]
    %v811 = vld [vmem:[#allocation7 + $0xa0] sm:$0xff]
    %v812 = vld [vmem:[#allocation7 + $0xa8] sm:$0xff]
    %v813 = vld [vmem:[#allocation7 + $0xb0] sm:$0xff]
    %v814 = vld [vmem:[#allocation7 + $0xb8] sm:$0xff]
    %v815 = vld [vmem:[#allocation7 + $0xc0] sm:$0xff]
    %v816 = vld [vmem:[#allocation7 + $0xc8] sm:$0xff]
    %v817 = vld [vmem:[#allocation7 + $0xd0] sm:$0xff]
    %v818 = vld [vmem:[#allocation7 + $0xd8] sm:$0xff]
    %v819 = vld [vmem:[#allocation7 + $0xe0] sm:$0xff]
    %v820 = vld [vmem:[#allocation7 + $0xe8] sm:$0xff]
    %v821 = vld [vmem:[#allocation7 + $0xf0] sm:$0xff]
    %v822 = vld [vmem:[#allocation7 + $0xf8] sm:$0xff]
    %v823 = vld [vmem:[%s4] sm:$0xf]
    %v825 = vlaneseq
    %v826 = vshrl.u32 %v825, 7
    %v827 = vsub.s32 0, %v826
    %v828 = vrot.slane %v823, %v827
    %v829 = vlaneseq
    %v830 = vshrl.u32 %v829, 7
    %v831 = vsub.s32 1, %v830
    %v832 = vrot.slane %v823, %v831
    %v833 = vlaneseq
    %v834 = vshrl.u32 %v833, 7
    %v835 = vsub.s32 2, %v834
    %v836 = vrot.slane %v823, %v835
    %v837 = vlaneseq
    %v838 = vshrl.u32 %v837, 7
    %v839 = vsub.s32 3, %v838
    %v840 = vrot.slane %v823, %v839
    %v877 = vunpack.c.l.b16 %v791
    %v878 = vunpack.c.h.b16 %v791
    %v879 = vunpack.c.l.b16 %v792
    %v880 = vunpack.c.h.b16 %v792
    %v881 = vunpack.c.l.b16 %v793
    %v882 = vunpack.c.h.b16 %v793
    %v883 = vunpack.c.l.b16 %v794
    %v884 = vunpack.c.h.b16 %v794
    %v885 = vunpack.c.l.b16 %v795
    %v886 = vunpack.c.h.b16 %v795
    %v887 = vunpack.c.l.b16 %v796
    %v888 = vunpack.c.h.b16 %v796
    %v889 = vunpack.c.l.b16 %v797
    %v890 = vunpack.c.h.b16 %v797
    %v891 = vunpack.c.l.b16 %v798
    %v892 = vunpack.c.h.b16 %v798
    %v893 = vunpack.c.l.b16 %v799
    %v894 = vunpack.c.h.b16 %v799
    %v895 = vunpack.c.l.b16 %v800
    %v896 = vunpack.c.h.b16 %v800
    %v897 = vunpack.c.l.b16 %v801
    %v898 = vunpack.c.h.b16 %v801
    %v899 = vunpack.c.l.b16 %v802
    %v900 = vunpack.c.h.b16 %v802
    %v901 = vunpack.c.l.b16 %v803
    %v902 = vunpack.c.h.b16 %v803
    %v903 = vunpack.c.l.b16 %v804
    %v904 = vunpack.c.h.b16 %v804
    %v905 = vunpack.c.l.b16 %v805
    %v906 = vunpack.c.h.b16 %v805
    %v907 = vunpack.c.l.b16 %v806
    %v908 = vunpack.c.h.b16 %v806
    %v909 = vunpack.c.l.b16 %v807
    %v910 = vunpack.c.h.b16 %v807
    %v911 = vunpack.c.l.b16 %v808
    %v912 = vunpack.c.h.b16 %v808
    %v913 = vunpack.c.l.b16 %v809
    %v914 = vunpack.c.h.b16 %v809
    %v915 = vunpack.c.l.b16 %v810
    %v916 = vunpack.c.h.b16 %v810
    %v917 = vunpack.c.l.b16 %v811
    %v918 = vunpack.c.h.b16 %v811
    %v919 = vunpack.c.l.b16 %v812
    %v920 = vunpack.c.h.b16 %v812
    %v921 = vunpack.c.l.b16 %v813
    %v922 = vunpack.c.h.b16 %v813
    %v923 = vunpack.c.l.b16 %v814
    %v924 = vunpack.c.h.b16 %v814
    %v925 = vunpack.c.l.b16 %v815
    %v926 = vunpack.c.h.b16 %v815
    %v927 = vunpack.c.l.b16 %v816
    %v928 = vunpack.c.h.b16 %v816
    %v929 = vunpack.c.l.b16 %v817
    %v930 = vunpack.c.h.b16 %v817
    %v931 = vunpack.c.l.b16 %v818
    %v932 = vunpack.c.h.b16 %v818
    %v933 = vunpack.c.l.b16 %v819
    %v934 = vunpack.c.h.b16 %v819
    %v935 = vunpack.c.l.b16 %v820
    %v936 = vunpack.c.h.b16 %v820
    %v937 = vunpack.c.l.b16 %v821
    %v938 = vunpack.c.h.b16 %v821
    %v939 = vunpack.c.l.b16 %v822
    %v940 = vunpack.c.h.b16 %v822
    %v941 = vpack.c.b16 %v881, %v877
    %v942 = vpack.c.b16 %v882, %v878
    %v943 = vpack.c.b16 %v883, %v879
    %v944 = vpack.c.b16 %v884, %v880
    %v945 = vpack.c.b16 %v889, %v885
    %v946 = vpack.c.b16 %v890, %v886
    %v947 = vpack.c.b16 %v891, %v887
    %v948 = vpack.c.b16 %v892, %v888
    %v949 = vpack.c.b16 %v897, %v893
    %v950 = vpack.c.b16 %v898, %v894
    %v951 = vpack.c.b16 %v899, %v895
    %v952 = vpack.c.b16 %v900, %v896
    %v953 = vpack.c.b16 %v905, %v901
    %v954 = vpack.c.b16 %v906, %v902
    %v955 = vpack.c.b16 %v907, %v903
    %v956 = vpack.c.b16 %v908, %v904
    %v957 = vpack.c.b16 %v913, %v909
    %v958 = vpack.c.b16 %v914, %v910
    %v959 = vpack.c.b16 %v915, %v911
    %v960 = vpack.c.b16 %v916, %v912
    %v961 = vpack.c.b16 %v921, %v917
    %v962 = vpack.c.b16 %v922, %v918
    %v963 = vpack.c.b16 %v923, %v919
    %v964 = vpack.c.b16 %v924, %v920
    %v965 = vpack.c.b16 %v929, %v925
    %v966 = vpack.c.b16 %v930, %v926
    %v967 = vpack.c.b16 %v931, %v927
    %v968 = vpack.c.b16 %v932, %v928
    %v969 = vpack.c.b16 %v937, %v933
    %v970 = vpack.c.b16 %v938, %v934
    %v971 = vpack.c.b16 %v939, %v935
    %v972 = vpack.c.b16 %v940, %v936
    %1005 = vmatprep.subr.bf16.mxu0 %v942
    %1006 = vmatpush1.bf16.msra.mxu0 %v941
    %1007 = vmatprep.subr.bf16.mxu0 %v946
    %1008 = vmatpush1.bf16.msra.mxu0 %v945
    %1009 = vmatprep.subr.bf16.mxu0 %v950
    %1010 = vmatpush1.bf16.msra.mxu0 %v949
    %1011 = vmatprep.subr.bf16.mxu0 %v954
    %1012 = vmatpush1.bf16.msra.mxu0 %v953
    %1013 = vmatprep.subr.bf16.mxu0 %v958
    %1014 = vmatpush1.bf16.msra.mxu0 %v957
    %1015 = vmatprep.subr.bf16.mxu0 %v962
    %1016 = vmatpush1.bf16.msra.mxu0 %v961
    %1017 = vmatprep.subr.bf16.mxu0 %v966
    %1018 = vmatpush1.bf16.msra.mxu0 %v965
    %1019 = vmatprep.subr.bf16.mxu0 %v970
    %1020 = vmatpush1.bf16.msra.mxu0 %v969
    %1021 = vmatprep.subr.bf16.mxu0 0
    %1022 = vmatpush1.bf16.msra.mxu0 0
    %1023 = vmatprep.subr.bf16.mxu0 0
    %1024 = vmatpush1.bf16.msra.mxu0 0
    %1025 = vmatprep.subr.bf16.mxu0 0
    %1026 = vmatpush1.bf16.msra.mxu0 0
    %1027 = vmatprep.subr.bf16.mxu0 0
    %1028 = vmatpush1.bf16.msra.mxu0 0
    %1029 = vmatprep.subr.bf16.mxu0 0
    %1030 = vmatpush1.bf16.msra.mxu0 0
    %1031 = vmatprep.subr.bf16.mxu0 0
    %1032 = vmatpush1.bf16.msra.mxu0 0
    %1033 = vmatprep.subr.bf16.mxu0 0
    %1034 = vmatpush1.bf16.msra.mxu0 0
    %1035 = vmatprep.subr.bf16.mxu0 0
    %1036 = vmatpush1.bf16.msra.mxu0 0
    %1037 = vmatprep.mubr.bf16.mxu0 0
    %1038 = vmatmul.mubr.bf16.gmra.mrb[0].mxu0 %v790
    %v1039 = vpop.f32.mrb[0].mxu0
    %v1040 = vadd.f32 %v828, %v1039
    %v1041 = vpop.f32.mrb[0].mxu0
    %v1042 = vadd.f32 %v832, %v1041
    %v1043 = vpop.f32.mrb[0].mxu0
    %v1044 = vpop.f32.mrb[0].mxu0
    %1045 = vdwg.mxu0
    %1046 = vmatprep.subr.bf16.mxu0 %v944
    %1047 = vmatpush1.bf16.msra.mxu0 %v943
    %1048 = vmatprep.subr.bf16.mxu0 %v948
    %1049 = vmatpush1.bf16.msra.mxu0 %v947
    %1050 = vmatprep.subr.bf16.mxu0 %v952
    %1051 = vmatpush1.bf16.msra.mxu0 %v951
    %1052 = vmatprep.subr.bf16.mxu0 %v956
    %1053 = vmatpush1.bf16.msra.mxu0 %v955
    %1054 = vmatprep.subr.bf16.mxu0 %v960
    %1055 = vmatpush1.bf16.msra.mxu0 %v959
    %1056 = vmatprep.subr.bf16.mxu0 %v964
    %1057 = vmatpush1.bf16.msra.mxu0 %v963
    %1058 = vmatprep.subr.bf16.mxu0 %v968
    %1059 = vmatpush1.bf16.msra.mxu0 %v967
    %1060 = vmatprep.subr.bf16.mxu0 %v972
    %1061 = vmatpush1.bf16.msra.mxu0 %v971
    %1062 = vmatprep.subr.bf16.mxu0 0
    %1063 = vmatpush1.bf16.msra.mxu0 0
    %1064 = vmatprep.subr.bf16.mxu0 0
    %1065 = vmatpush1.bf16.msra.mxu0 0
    %1066 = vmatprep.subr.bf16.mxu0 0
    %1067 = vmatpush1.bf16.msra.mxu0 0
    %1068 = vmatprep.subr.bf16.mxu0 0
    %1069 = vmatpush1.bf16.msra.mxu0 0
    %1070 = vmatprep.subr.bf16.mxu0 0
    %1071 = vmatpush1.bf16.msra.mxu0 0
    %1072 = vmatprep.subr.bf16.mxu0 0
    %1073 = vmatpush1.bf16.msra.mxu0 0
    %1074 = vmatprep.subr.bf16.mxu0 0
    %1075 = vmatpush1.bf16.msra.mxu0 0
    %1076 = vmatprep.subr.bf16.mxu0 0
    %1077 = vmatpush1.bf16.msra.mxu0 0
    %1078 = vmatprep.mubr.bf16.mxu0 0
    %1079 = vmatmul.mubr.bf16.gmra.mrb[0].mxu0 %v790
    %v1080 = vpop.f32.mrb[0].mxu0
    %v1081 = vadd.f32 %v836, %v1080
    %v1082 = vpop.f32.mrb[0].mxu0
    %v1083 = vadd.f32 %v840, %v1082
    %v1084 = vpop.f32.mrb[0].mxu0
    %v1085 = vpop.f32.mrb[0].mxu0
    %1086 = vdwg.mxu0
    %1087 = vmax.xlane.f32.xlu0 %v1040
    %v1088 = vpop.xlane.xlu0 %1087
    %v1089 = vsub.f32 %v1040, %v1088
    %v1090 = vmul.f32 %v1089, 1.442695
    %v1091 = vpow.pop %v1090
    %v1092 = vpack.c.bf16 %v1091, %v1091
    %1093 = vmax.xlane.f32.xlu0 %v1042
    %v1094 = vpop.xlane.xlu0 %1093
    %v1095 = vsub.f32 %v1042, %v1094
    %v1096 = vmul.f32 %v1095, 1.442695
    %v1097 = vpow.pop %v1096
    %v1098 = vpack.c.bf16 %v1097, %v1097
    %1099 = vmax.xlane.f32.xlu0 %v1081
    %v1100 = vpop.xlane.xlu0 %1099
    %v1101 = vsub.f32 %v1081, %v1100
    %v1102 = vmul.f32 %v1101, 1.442695
    %v1103 = vpow.pop %v1102
    %v1104 = vpack.c.bf16 %v1103, %v1103
    %1105 = vmax.xlane.f32.xlu0 %v1083
    %v1106 = vpop.xlane.xlu0 %1105
    %v1107 = vsub.f32 %v1083, %v1106
    %v1108 = vmul.f32 %v1107, 1.442695
    %v1109 = vpow.pop %v1108
    %v1110 = vpack.c.bf16 %v1109, %v1109
    %v1111 = vld [vmem:[#allocation8] sm:$0xff]
    %v1112 = vld [vmem:[#allocation8 + $0x8] sm:$0xff]
    %v1113 = vld [vmem:[#allocation8 + $0x10] sm:$0xff]
    %v1114 = vld [vmem:[#allocation8 + $0x18] sm:$0xff]
    %v1115 = vld [vmem:[#allocation8 + $0x20] sm:$0xff]
    %v1116 = vld [vmem:[#allocation8 + $0x28] sm:$0xff]
    %v1117 = vld [vmem:[#allocation8 + $0x30] sm:$0xff]
    %v1118 = vld [vmem:[#allocation8 + $0x38] sm:$0xff]
    %v1119 = vld [vmem:[#allocation8 + $0x40] sm:$0xff]
    %v1120 = vld [vmem:[#allocation8 + $0x48] sm:$0xff]
    %v1121 = vld [vmem:[#allocation8 + $0x50] sm:$0xff]
    %v1122 = vld [vmem:[#allocation8 + $0x58] sm:$0xff]
    %v1123 = vld [vmem:[#allocation8 + $0x60] sm:$0xff]
    %v1124 = vld [vmem:[#allocation8 + $0x68] sm:$0xff]
    %v1125 = vld [vmem:[#allocation8 + $0x70] sm:$0xff]
    %v1126 = vld [vmem:[#allocation8 + $0x78] sm:$0xff]
    %v1127 = vld [vmem:[#allocation8 + $0x80] sm:$0xff]
    %v1128 = vld [vmem:[#allocation8 + $0x88] sm:$0xff]
    %v1129 = vld [vmem:[#allocation8 + $0x90] sm:$0xff]
    %v1130 = vld [vmem:[#allocation8 + $0x98] sm:$0xff]
    %v1131 = vld [vmem:[#allocation8 + $0xa0] sm:$0xff]
    %v1132 = vld [vmem:[#allocation8 + $0xa8] sm:$0xff]
    %v1133 = vld [vmem:[#allocation8 + $0xb0] sm:$0xff]
    %v1134 = vld [vmem:[#allocation8 + $0xb8] sm:$0xff]
    %v1135 = vld [vmem:[#allocation8 + $0xc0] sm:$0xff]
    %v1136 = vld [vmem:[#allocation8 + $0xc8] sm:$0xff]
    %v1137 = vld [vmem:[#allocation8 + $0xd0] sm:$0xff]
    %v1138 = vld [vmem:[#allocation8 + $0xd8] sm:$0xff]
    %v1139 = vld [vmem:[#allocation8 + $0xe0] sm:$0xff]
    %v1140 = vld [vmem:[#allocation8 + $0xe8] sm:$0xff]
    %v1141 = vld [vmem:[#allocation8 + $0xf0] sm:$0xff]
    %v1142 = vld [vmem:[#allocation8 + $0xf8] sm:$0xff]
    %v1143 = vld [vmem:[#allocation8 + $0x100] sm:$0xff]
    %v1144 = vld [vmem:[#allocation8 + $0x108] sm:$0xff]
    %v1145 = vld [vmem:[#allocation8 + $0x110] sm:$0xff]
    %v1146 = vld [vmem:[#allocation8 + $0x118] sm:$0xff]
    %v1147 = vld [vmem:[#allocation8 + $0x120] sm:$0xff]
    %v1148 = vld [vmem:[#allocation8 + $0x128] sm:$0xff]
    %v1149 = vld [vmem:[#allocation8 + $0x130] sm:$0xff]
    %v1150 = vld [vmem:[#allocation8 + $0x138] sm:$0xff]
    %v1151 = vld [vmem:[#allocation8 + $0x140] sm:$0xff]
    %v1152 = vld [vmem:[#allocation8 + $0x148] sm:$0xff]
    %v1153 = vld [vmem:[#allocation8 + $0x150] sm:$0xff]
    %v1154 = vld [vmem:[#allocation8 + $0x158] sm:$0xff]
    %v1155 = vld [vmem:[#allocation8 + $0x160] sm:$0xff]
    %v1156 = vld [vmem:[#allocation8 + $0x168] sm:$0xff]
    %v1157 = vld [vmem:[#allocation8 + $0x170] sm:$0xff]
    %v1158 = vld [vmem:[#allocation8 + $0x178] sm:$0xff]
    %v1159 = vld [vmem:[#allocation8 + $0x180] sm:$0xff]
    %v1160 = vld [vmem:[#allocation8 + $0x188] sm:$0xff]
    %v1161 = vld [vmem:[#allocation8 + $0x190] sm:$0xff]
    %v1162 = vld [vmem:[#allocation8 + $0x198] sm:$0xff]
    %v1163 = vld [vmem:[#allocation8 + $0x1a0] sm:$0xff]
    %v1164 = vld [vmem:[#allocation8 + $0x1a8] sm:$0xff]
    %v1165 = vld [vmem:[#allocation8 + $0x1b0] sm:$0xff]
    %v1166 = vld [vmem:[#allocation8 + $0x1b8] sm:$0xff]
    %v1167 = vld [vmem:[#allocation8 + $0x1c0] sm:$0xff]
    %v1168 = vld [vmem:[#allocation8 + $0x1c8] sm:$0xff]
    %v1169 = vld [vmem:[#allocation8 + $0x1d0] sm:$0xff]
    %v1170 = vld [vmem:[#allocation8 + $0x1d8] sm:$0xff]
    %v1171 = vld [vmem:[#allocation8 + $0x1e0] sm:$0xff]
    %v1172 = vld [vmem:[#allocation8 + $0x1e8] sm:$0xff]
    %v1173 = vld [vmem:[#allocation8 + $0x1f0] sm:$0xff]
    %v1174 = vld [vmem:[#allocation8 + $0x1f8] sm:$0xff]
    %v1239 = vunpack.c.l.b16 %v1111
    %v1240 = vunpack.c.h.b16 %v1111
    %v1241 = vunpack.c.l.b16 %v1112
    %v1242 = vunpack.c.h.b16 %v1112
    %v1243 = vunpack.c.l.b16 %v1113
    %v1244 = vunpack.c.h.b16 %v1113
    %v1245 = vunpack.c.l.b16 %v1114
    %v1246 = vunpack.c.h.b16 %v1114
    %v1247 = vunpack.c.l.b16 %v1115
    %v1248 = vunpack.c.h.b16 %v1115
    %v1249 = vunpack.c.l.b16 %v1116
    %v1250 = vunpack.c.h.b16 %v1116
    %v1251 = vunpack.c.l.b16 %v1117
    %v1252 = vunpack.c.h.b16 %v1117
    %v1253 = vunpack.c.l.b16 %v1118
    %v1254 = vunpack.c.h.b16 %v1118
    %v1255 = vunpack.c.l.b16 %v1119
    %v1256 = vunpack.c.h.b16 %v1119
    %v1257 = vunpack.c.l.b16 %v1120
    %v1258 = vunpack.c.h.b16 %v1120
    %v1259 = vunpack.c.l.b16 %v1121
    %v1260 = vunpack.c.h.b16 %v1121
    %v1261 = vunpack.c.l.b16 %v1122
    %v1262 = vunpack.c.h.b16 %v1122
    %v1263 = vunpack.c.l.b16 %v1123
    %v1264 = vunpack.c.h.b16 %v1123
    %v1265 = vunpack.c.l.b16 %v1124
    %v1266 = vunpack.c.h.b16 %v1124
    %v1267 = vunpack.c.l.b16 %v1125
    %v1268 = vunpack.c.h.b16 %v1125
    %v1269 = vunpack.c.l.b16 %v1126
    %v1270 = vunpack.c.h.b16 %v1126
    %v1271 = vunpack.c.l.b16 %v1127
    %v1272 = vunpack.c.h.b16 %v1127
    %v1273 = vunpack.c.l.b16 %v1128
    %v1274 = vunpack.c.h.b16 %v1128
    %v1275 = vunpack.c.l.b16 %v1129
    %v1276 = vunpack.c.h.b16 %v1129
    %v1277 = vunpack.c.l.b16 %v1130
    %v1278 = vunpack.c.h.b16 %v1130
    %v1279 = vunpack.c.l.b16 %v1131
    %v1280 = vunpack.c.h.b16 %v1131
    %v1281 = vunpack.c.l.b16 %v1132
    %v1282 = vunpack.c.h.b16 %v1132
    %v1283 = vunpack.c.l.b16 %v1133
    %v1284 = vunpack.c.h.b16 %v1133
    %v1285 = vunpack.c.l.b16 %v1134
    %v1286 = vunpack.c.h.b16 %v1134
    %v1287 = vunpack.c.l.b16 %v1135
    %v1288 = vunpack.c.h.b16 %v1135
    %v1289 = vunpack.c.l.b16 %v1136
    %v1290 = vunpack.c.h.b16 %v1136
    %v1291 = vunpack.c.l.b16 %v1137
    %v1292 = vunpack.c.h.b16 %v1137
    %v1293 = vunpack.c.l.b16 %v1138
    %v1294 = vunpack.c.h.b16 %v1138
    %v1295 = vunpack.c.l.b16 %v1139
    %v1296 = vunpack.c.h.b16 %v1139
    %v1297 = vunpack.c.l.b16 %v1140
    %v1298 = vunpack.c.h.b16 %v1140
    %v1299 = vunpack.c.l.b16 %v1141
    %v1300 = vunpack.c.h.b16 %v1141
    %v1301 = vunpack.c.l.b16 %v1142
    %v1302 = vunpack.c.h.b16 %v1142
    %v1303 = vunpack.c.l.b16 %v1143
    %v1304 = vunpack.c.h.b16 %v1143
    %v1305 = vunpack.c.l.b16 %v1144
    %v1306 = vunpack.c.h.b16 %v1144
    %v1307 = vunpack.c.l.b16 %v1145
    %v1308 = vunpack.c.h.b16 %v1145
    %v1309 = vunpack.c.l.b16 %v1146
    %v1310 = vunpack.c.h.b16 %v1146
    %v1311 = vunpack.c.l.b16 %v1147
    %v1312 = vunpack.c.h.b16 %v1147
    %v1313 = vunpack.c.l.b16 %v1148
    %v1314 = vunpack.c.h.b16 %v1148
    %v1315 = vunpack.c.l.b16 %v1149
    %v1316 = vunpack.c.h.b16 %v1149
    %v1317 = vunpack.c.l.b16 %v1150
    %v1318 = vunpack.c.h.b16 %v1150
    %v1319 = vunpack.c.l.b16 %v1151
    %v1320 = vunpack.c.h.b16 %v1151
    %v1321 = vunpack.c.l.b16 %v1152
    %v1322 = vunpack.c.h.b16 %v1152
    %v1323 = vunpack.c.l.b16 %v1153
    %v1324 = vunpack.c.h.b16 %v1153
    %v1325 = vunpack.c.l.b16 %v1154
    %v1326 = vunpack.c.h.b16 %v1154
    %v1327 = vunpack.c.l.b16 %v1155
    %v1328 = vunpack.c.h.b16 %v1155
    %v1329 = vunpack.c.l.b16 %v1156
    %v1330 = vunpack.c.h.b16 %v1156
    %v1331 = vunpack.c.l.b16 %v1157
    %v1332 = vunpack.c.h.b16 %v1157
    %v1333 = vunpack.c.l.b16 %v1158
    %v1334 = vunpack.c.h.b16 %v1158
    %v1335 = vunpack.c.l.b16 %v1159
    %v1336 = vunpack.c.h.b16 %v1159
    %v1337 = vunpack.c.l.b16 %v1160
    %v1338 = vunpack.c.h.b16 %v1160
    %v1339 = vunpack.c.l.b16 %v1161
    %v1340 = vunpack.c.h.b16 %v1161
    %v1341 = vunpack.c.l.b16 %v1162
    %v1342 = vunpack.c.h.b16 %v1162
    %v1343 = vunpack.c.l.b16 %v1163
    %v1344 = vunpack.c.h.b16 %v1163
    %v1345 = vunpack.c.l.b16 %v1164
    %v1346 = vunpack.c.h.b16 %v1164
    %v1347 = vunpack.c.l.b16 %v1165
    %v1348 = vunpack.c.h.b16 %v1165
    %v1349 = vunpack.c.l.b16 %v1166
    %v1350 = vunpack.c.h.b16 %v1166
    %v1351 = vunpack.c.l.b16 %v1167
    %v1352 = vunpack.c.h.b16 %v1167
    %v1353 = vunpack.c.l.b16 %v1168
    %v1354 = vunpack.c.h.b16 %v1168
    %v1355 = vunpack.c.l.b16 %v1169
    %v1356 = vunpack.c.h.b16 %v1169
    %v1357 = vunpack.c.l.b16 %v1170
    %v1358 = vunpack.c.h.b16 %v1170
    %v1359 = vunpack.c.l.b16 %v1171
    %v1360 = vunpack.c.h.b16 %v1171
    %v1361 = vunpack.c.l.b16 %v1172
    %v1362 = vunpack.c.h.b16 %v1172
    %v1363 = vunpack.c.l.b16 %v1173
    %v1364 = vunpack.c.h.b16 %v1173
    %v1365 = vunpack.c.l.b16 %v1174
    %v1366 = vunpack.c.h.b16 %v1174
    %v1367 = vpack.c.b16 %v1241, %v1239
    %v1368 = vpack.c.b16 %v1242, %v1240
    %v1369 = vpack.c.b16 %v1245, %v1243
    %v1370 = vpack.c.b16 %v1246, %v1244
    %v1371 = vpack.c.b16 %v1249, %v1247
    %v1372 = vpack.c.b16 %v1250, %v1248
    %v1373 = vpack.c.b16 %v1253, %v1251
    %v1374 = vpack.c.b16 %v1254, %v1252
    %v1375 = vpack.c.b16 %v1257, %v1255
    %v1376 = vpack.c.b16 %v1258, %v1256
    %v1377 = vpack.c.b16 %v1261, %v1259
    %v1378 = vpack.c.b16 %v1262, %v1260
    %v1379 = vpack.c.b16 %v1265, %v1263
    %v1380 = vpack.c.b16 %v1266, %v1264
    %v1381 = vpack.c.b16 %v1269, %v1267
    %v1382 = vpack.c.b16 %v1270, %v1268
    %v1383 = vpack.c.b16 %v1273, %v1271
    %v1384 = vpack.c.b16 %v1274, %v1272
    %v1385 = vpack.c.b16 %v1277, %v1275
    %v1386 = vpack.c.b16 %v1278, %v1276
    %v1387 = vpack.c.b16 %v1281, %v1279
    %v1388 = vpack.c.b16 %v1282, %v1280
    %v1389 = vpack.c.b16 %v1285, %v1283
    %v1390 = vpack.c.b16 %v1286, %v1284
    %v1391 = vpack.c.b16 %v1289, %v1287
    %v1392 = vpack.c.b16 %v1290, %v1288
    %v1393 = vpack.c.b16 %v1293, %v1291
    %v1394 = vpack.c.b16 %v1294, %v1292
    %v1395 = vpack.c.b16 %v1297, %v1295
    %v1396 = vpack.c.b16 %v1298, %v1296
    %v1397 = vpack.c.b16 %v1301, %v1299
    %v1398 = vpack.c.b16 %v1302, %v1300
    %v1399 = vpack.c.b16 %v1305, %v1303
    %v1400 = vpack.c.b16 %v1306, %v1304
    %v1401 = vpack.c.b16 %v1309, %v1307
    %v1402 = vpack.c.b16 %v1310, %v1308
    %v1403 = vpack.c.b16 %v1313, %v1311
    %v1404 = vpack.c.b16 %v1314, %v1312
    %v1405 = vpack.c.b16 %v1317, %v1315
    %v1406 = vpack.c.b16 %v1318, %v1316
    %v1407 = vpack.c.b16 %v1321, %v1319
    %v1408 = vpack.c.b16 %v1322, %v1320
    %v1409 = vpack.c.b16 %v1325, %v1323
    %v1410 = vpack.c.b16 %v1326, %v1324
    %v1411 = vpack.c.b16 %v1329, %v1327
    %v1412 = vpack.c.b16 %v1330, %v1328
    %v1413 = vpack.c.b16 %v1333, %v1331
    %v1414 = vpack.c.b16 %v1334, %v1332
    %v1415 = vpack.c.b16 %v1337, %v1335
    %v1416 = vpack.c.b16 %v1338, %v1336
    %v1417 = vpack.c.b16 %v1341, %v1339
    %v1418 = vpack.c.b16 %v1342, %v1340
    %v1419 = vpack.c.b16 %v1345, %v1343
    %v1420 = vpack.c.b16 %v1346, %v1344
    %v1421 = vpack.c.b16 %v1349, %v1347
    %v1422 = vpack.c.b16 %v1350, %v1348
    %v1423 = vpack.c.b16 %v1353, %v1351
    %v1424 = vpack.c.b16 %v1354, %v1352
    %v1425 = vpack.c.b16 %v1357, %v1355
    %v1426 = vpack.c.b16 %v1358, %v1356
    %v1427 = vpack.c.b16 %v1361, %v1359
    %v1428 = vpack.c.b16 %v1362, %v1360
    %v1429 = vpack.c.b16 %v1365, %v1363
    %v1430 = vpack.c.b16 %v1366, %v1364
    %1495 = vmatprep.subr.bf16.mxu0 %v1368
    %1496 = vmatpush1.bf16.msra.mxu0 %v1367
    %1497 = vmatprep.subr.bf16.mxu0 %v1370
    %1498 = vmatpush1.bf16.msra.mxu0 %v1369
    %1499 = vmatprep.subr.bf16.mxu0 %v1372
    %1500 = vmatpush1.bf16.msra.mxu0 %v1371
    %1501 = vmatprep.subr.bf16.mxu0 %v1374
    %1502 = vmatpush1.bf16.msra.mxu0 %v1373
    %1503 = vmatprep.subr.bf16.mxu0 %v1376
    %1504 = vmatpush1.bf16.msra.mxu0 %v1375
    %1505 = vmatprep.subr.bf16.mxu0 %v1378
    %1506 = vmatpush1.bf16.msra.mxu0 %v1377
    %1507 = vmatprep.subr.bf16.mxu0 %v1380
    %1508 = vmatpush1.bf16.msra.mxu0 %v1379
    %1509 = vmatprep.subr.bf16.mxu0 %v1382
    %1510 = vmatpush1.bf16.msra.mxu0 %v1381
    %1511 = vmatprep.subr.bf16.mxu0 %v1384
    %1512 = vmatpush1.bf16.msra.mxu0 %v1383
    %1513 = vmatprep.subr.bf16.mxu0 %v1386
    %1514 = vmatpush1.bf16.msra.mxu0 %v1385
    %1515 = vmatprep.subr.bf16.mxu0 %v1388
    %1516 = vmatpush1.bf16.msra.mxu0 %v1387
    %1517 = vmatprep.subr.bf16.mxu0 %v1390
    %1518 = vmatpush1.bf16.msra.mxu0 %v1389
    %1519 = vmatprep.subr.bf16.mxu0 %v1392
    %1520 = vmatpush1.bf16.msra.mxu0 %v1391
    %1521 = vmatprep.subr.bf16.mxu0 %v1394
    %1522 = vmatpush1.bf16.msra.mxu0 %v1393
    %1523 = vmatprep.subr.bf16.mxu0 %v1396
    %1524 = vmatpush1.bf16.msra.mxu0 %v1395
    %1525 = vmatprep.subr.bf16.mxu0 %v1398
    %1526 = vmatpush1.bf16.msra.mxu0 %v1397
    %1527 = vmatprep.mubr.bf16.mxu0 %v1098
    %1528 = vmatmul.mubr.bf16.gmra.mrb[0].mxu0 %v1092
    %v1529 = vpop.f32.mrb[0].mxu0
    %v1530 = vadd.f32 0.0, %v1529
    %v1531 = vpop.f32.mrb[0].mxu0
    %v1532 = vadd.f32 0.0, %v1531
    %v1533 = vpop.f32.mrb[0].mxu0
    %v1534 = vpop.f32.mrb[0].mxu0
    %1535 = vdwg.mxu0
    %1536 = vmatprep.subr.bf16.mxu0 %v1400
    %1537 = vmatpush1.bf16.msra.mxu0 %v1399
    %1538 = vmatprep.subr.bf16.mxu0 %v1402
    %1539 = vmatpush1.bf16.msra.mxu0 %v1401
    %1540 = vmatprep.subr.bf16.mxu0 %v1404
    %1541 = vmatpush1.bf16.msra.mxu0 %v1403
    %1542 = vmatprep.subr.bf16.mxu0 %v1406
    %1543 = vmatpush1.bf16.msra.mxu0 %v1405
    %1544 = vmatprep.subr.bf16.mxu0 %v1408
    %1545 = vmatpush1.bf16.msra.mxu0 %v1407
    %1546 = vmatprep.subr.bf16.mxu0 %v1410
    %1547 = vmatpush1.bf16.msra.mxu0 %v1409
    %1548 = vmatprep.subr.bf16.mxu0 %v1412
    %1549 = vmatpush1.bf16.msra.mxu0 %v1411
    %1550 = vmatprep.subr.bf16.mxu0 %v1414
    %1551 = vmatpush1.bf16.msra.mxu0 %v1413
    %1552 = vmatprep.subr.bf16.mxu0 %v1416
    %1553 = vmatpush1.bf16.msra.mxu0 %v1415
    %1554 = vmatprep.subr.bf16.mxu0 %v1418
    %1555 = vmatpush1.bf16.msra.mxu0 %v1417
    %1556 = vmatprep.subr.bf16.mxu0 %v1420
    %1557 = vmatpush1.bf16.msra.mxu0 %v1419
    %1558 = vmatprep.subr.bf16.mxu0 %v1422
    %1559 = vmatpush1.bf16.msra.mxu0 %v1421
    %1560 = vmatprep.subr.bf16.mxu0 %v1424
    %1561 = vmatpush1.bf16.msra.mxu0 %v1423
    %1562 = vmatprep.subr.bf16.mxu0 %v1426
    %1563 = vmatpush1.bf16.msra.mxu0 %v1425
    %1564 = vmatprep.subr.bf16.mxu0 %v1428
    %1565 = vmatpush1.bf16.msra.mxu0 %v1427
    %1566 = vmatprep.subr.bf16.mxu0 %v1430
    %1567 = vmatpush1.bf16.msra.mxu0 %v1429
    %1568 = vmatprep.mubr.bf16.mxu0 %v1110
    %1569 = vmatmul.mubr.bf16.gmra.mrb[0].mxu0 %v1104
    %v1570 = vpop.f32.mrb[0].mxu0
    %v1571 = vadd.f32 %v1530, %v1570
    %v1572 = vpop.f32.mrb[0].mxu0
    %v1573 = vadd.f32 %v1532, %v1572
    %v1574 = vpop.f32.mrb[0].mxu0
    %v1575 = vpop.f32.mrb[0].mxu0
    %1576 = vdwg.mxu0
    %v1577 = vrcp.pop %v1573
    %v1578 = vmul.f32 %v1571, %v1577
    %1579 = vst [vmem:[#allocation10] sm:$0xff] %v1578
    // Predicated region
    $region42: #{tpu_custom_call.1} parent=1 // pred_check
      _
    $region43: #{tpu_custom_call.1} parent=1 // pred_check_branch
      %1581 = sbr.rel (0) target = $region45
    $region44: #{tpu_custom_call.1} parent=1 // pred_region
      %s1583 = ssub.s32 128, 128
      %1584 = vsyncadd [#allocation4], %s1583
      %s1586 = sshll.u32 [#allocation10], 4
      %s1587 = int_to_ptr.vmem [resolvable:$true] %s1586
      %1589 = dma.vmem_to_hbm [thread:$0]  %s1587, 128, %s6, [#allocation4]
    $region45: #{tpu_custom_call.1} parent=1 // pred_fallthru
      _
    // Predicated region
    $region46: #{tpu_custom_call.1} parent=1 // pred_check
      _
    $region47: #{tpu_custom_call.1} parent=1 // pred_check_branch
      %1591 = sbr.rel (0) target = $region49
    $region48: #{tpu_custom_call.1} parent=1 // pred_region
      %1592 = dma.done [#allocation4], 128
    $region49: #{tpu_custom_call.1} parent=1 // pred_fallthru
      _
    %1593 = vsyncpa [#allocation3], 1
    %1594 = vsyncpa [#allocation6], 1
    %1595 = vsyncpa [#allocation9], 1
    %1596 = vsyncpa [#allocation4], 1

</llo_original>
